<compile_context>
chip_gen: v6e
topology: v6e:2x2x1
jax: 0.10.0
libtpu: 0.0.40
codegen_flags: <defaults>
</compile_context>

<pallas_src>
import functools

import jax
import jax.numpy as jnp
from jax.experimental import pallas as pl
from jax.experimental.pallas import tpu as pltpu

EPS = 1e-5  # PyTorch GroupNorm default eps


def _silu(v):
    return v * jax.nn.sigmoid(v)


# ----------------------------- the Pallas kernel ------------------------------

def encoder_block_kernel(
    h0_ref, fmul_ref, fadd_ref,
    mask_ref, seg_ref, segT_ref,
    g1i_ref, g1t_ref, g2i_ref, g2t_ref,
    gn1w_ref, gn1b_ref, c1w_ref, c1b_ref,
    gn2w_ref, gn2b_ref, c2w_ref, c2b_ref,
    pw_ref, pb_ref, psel_ref,
    pooled_ref, skip_ref,
    *, k, in_c, inv_cnt1, inv_cnt2, mxu_dtype,
):
    pad = k // 2
    h0 = h0_ref[0]             # (c1, N): batch tile folded onto lanes, zero pads
    mask = mask_ref[...]       # (1, N):  1 at real columns, 0 at segment pads
    seg = seg_ref[...]         # (N, bt): column -> batch-segment indicator
    segT = segT_ref[...]       # (bt, N)
    n = h0.shape[1]

    def group_norm(h, hm, gind, gindT, w, b, inv_cnt):
        # Per-(group, batch-segment) statistics.  `hm` must be zero at pad
        # columns; one lane-reduction matmul + tiny group-indicator matmuls,
        # no python loop over groups, biased variance (matches PyTorch).
        rs = jnp.dot(hm, seg, preferred_element_type=jnp.float32)            # (C, bt)
        rq = jnp.dot(hm * hm, seg, preferred_element_type=jnp.float32)       # (C, bt)
        mean = jnp.dot(gind, rs, preferred_element_type=jnp.float32) * inv_cnt   # (G, bt)
        ex2 = jnp.dot(gind, rq, preferred_element_type=jnp.float32) * inv_cnt
        rstd = jax.lax.rsqrt(ex2 - mean * mean + EPS)
        mean_l = jnp.dot(jnp.dot(gindT, mean, preferred_element_type=jnp.float32),
                         segT, preferred_element_type=jnp.float32)           # (C, N)
        rstd_l = jnp.dot(jnp.dot(gindT, rstd, preferred_element_type=jnp.float32),
                         segT, preferred_element_type=jnp.float32)           # (C, N)
        return (h - mean_l) * rstd_l * w + b

    def conv_same(hin, w_ref):
        # Stride-1 'same' conv per batch segment as ONE MXU matmul:
        # weights are (Co, K*Ci); RHS is the K-tap im2col stack (sublane concat
        # of statically shifted views).  `hin` must be zero at segment pads so
        # adjacent batch segments cannot leak into each other.
        xin = hin.astype(mxu_dtype)
        zc = jnp.zeros((xin.shape[0], pad), xin.dtype)
        xp = jnp.concatenate([zc, xin, zc], axis=1)                          # (Ci, N+2*pad)
        rhs = jnp.concatenate([xp[:, t:t + n] for t in range(k)], axis=0)    # (K*Ci, N)
        return jnp.dot(w_ref[...].astype(mxu_dtype), rhs,
                       preferred_element_type=jnp.float32)                   # (Co, N) f32

    res = h0[:in_c, :]         # x part of cat(x, time_cond); pads are zero

    # ConvBlock1D: gn1 -> silu -> conv1 -> FiLM(time).FiLM(cond) -> gn2 -> silu -> conv2 -> +x
    h = group_norm(h0, h0, g1i_ref[...], g1t_ref[...],
                   gn1w_ref[...], gn1b_ref[...], inv_cnt1)
    h = _silu(h) * mask
    h = conv_same(h, c1w_ref) + c1b_ref[...]

    fm = jnp.dot(fmul_ref[0], segT, preferred_element_type=jnp.float32)      # (C, N)
    fa = jnp.dot(fadd_ref[0], segT, preferred_element_type=jnp.float32)
    h = h * fm + fa            # fused time/cond FiLM (MLPs hoisted to wrapper)

    h = group_norm(h, h * mask, g2i_ref[...], g2t_ref[...],
                   gn2w_ref[...], gn2b_ref[...], inv_cnt2)
    h = _silu(h) * mask
    h = conv_same(h, c2w_ref) + c2b_ref[...]

    skip = (h + res) * mask    # residual (to_out == Identity); re-zero pads
    skip_ref[0] = skip.astype(skip_ref.dtype)

    # pool: Conv1d(stride=2, padding=k//2) == stride-1 'same' conv evaluated at
    # even positions.  Even/valid-column extraction is a single matmul with a
    # constant 0/1 selection matrix (built once in the wrapper, never per step).
    full = conv_same(skip, pw_ref)                                           # (Cout, N)
    pooled = jnp.dot(full.astype(mxu_dtype), psel_ref[...].astype(mxu_dtype),
                     preferred_element_type=jnp.float32) + pb_ref[...]
    pooled_ref[0] = pooled.astype(pooled_ref.dtype)


# ----------------------------- wrapper ---------------------------------------

def encoder_block_1d(x, time, cond, time_cond, params, *, kernel_size=3,
                     ratio=2, mxu_dtype=jnp.float32, batch_tile=None):
    f32 = jnp.float32
    B, in_c, L = x.shape
    tc_c = time_cond.shape[1]
    c1 = in_c + tc_c
    out_c = params["p_w"].shape[0]
    k = kernel_size
    pad = k // 2

    assert ratio == 2 and L % 2 == 0, "this wrapper implements the ratio=2 pool"
    assert k % 2 == 1, "stride-2 pool <-> even-column identity needs odd kernel_size"
    g1 = min(16, c1 // 4)
    g2 = min(16, in_c // 4)
    assert c1 % g1 == 0 and in_c % g2 == 0, "GroupNorm needs divisible channel counts"

    Lp = L + 2 * pad           # per-batch padded segment length
    l_out = L // 2

    # ---- batch tile: fold several batch elements onto lanes per grid step ----
    if batch_tile is None:
        batch_tile = B
        for d in range(1, B + 1):
            if B % d == 0 and d * Lp >= 256:   # target >= 2 MXU tiles of lanes
                batch_tile = d
                break
    bt = batch_tile
    assert B % bt == 0
    n_tiles = B // bt
    N = bt * Lp                # lane width of one grid step
    n_out = bt * l_out

    col = lambda v: v.reshape(-1, 1).astype(f32)

    # ---- hoisted FiLM MLPs (batched XLA matmuls), fused into one affine ------
    silu = lambda v: v * jax.nn.sigmoid(v)
    te = silu(time.astype(f32) @ params["t_w1"] + params["t_b1"]) @ params["t_w2"] + params["t_b2"]
    ce = silu(cond.astype(f32) @ params["c_w1"] + params["c_b1"]) @ params["c_w2"] + params["c_b2"]
    tm, ta = te[:, :in_c], te[:, in_c:]
    cm, ca = ce[:, :in_c], ce[:, in_c:]
    film_mul = (tm * cm).astype(f32)        # (x*tm+ta)*cm+ca = x*(tm*cm) + (ta*cm+ca)
    film_add = (ta * cm + ca).astype(f32)   # (B, in_c)

    def tile_batch_cols(a, width):
        # (B, C, width) -> (n_tiles, C, bt*width): batch folded onto lanes.
        return (a.reshape(n_tiles, bt, a.shape[1], width)
                 .transpose(0, 2, 1, 3)
                 .reshape(n_tiles, a.shape[1], bt * width))

    # activations: cat(x, time_cond) with the conv zero-padding pre-baked
    h0 = jnp.concatenate([x, time_cond], axis=1).astype(f32)        # (B, c1, L)
    h0 = jnp.pad(h0, ((0, 0), (0, 0), (pad, pad)))                  # (B, c1, Lp)
    h0 = tile_batch_cols(h0, Lp)                                    # (n_tiles, c1, N)

    fmul = film_mul.reshape(n_tiles, bt, in_c).transpose(0, 2, 1)   # (n_tiles, in_c, bt)
    fadd = film_add.reshape(n_tiles, bt, in_c).transpose(0, 2, 1)

    # ---- constant helper matrices (built once, passed as kernel inputs) ------
    colid = jnp.arange(N)
    mask = (((colid % Lp) >= pad) & ((colid % Lp) < pad + L)).astype(f32)[None, :]
    seg = (colid[:, None] // Lp == jnp.arange(bt)[None, :]).astype(f32)      # (N, bt)
    segT = seg.T
    g1ind = (jnp.arange(c1)[None, :] // (c1 // g1)
             == jnp.arange(g1)[:, None]).astype(f32)                         # (g1, c1)
    g2ind = (jnp.arange(in_c)[None, :] // (in_c // g2)
             == jnp.arange(g2)[:, None]).astype(f32)                         # (g2, in_c)
    oid = jnp.arange(n_out)
    psel = (colid[:, None]
            == ((oid // l_out) * Lp + pad + 2 * (oid % l_out))[None, :]).astype(f32)

    # ---- conv weights reshaped for a single im2col matmul per conv -----------
    # (Co, Ci, K) -> (Co, K*Ci), column order (tap t, channel c) -> t*Ci + c.
    def conv_w(w):
        co, ci, kk = w.shape
        return w.transpose(0, 2, 1).reshape(co, kk * ci).astype(f32)

    inputs = [
        h0, fmul, fadd,
        mask, seg, segT,
        g1ind, g1ind.T, g2ind, g2ind.T,
        col(params["gn1_w"]), col(params["gn1_b"]),
        conv_w(params["c1_w"]), col(params["c1_b"]),
        col(params["gn2_w"]), col(params["gn2_b"]),
        conv_w(params["c2_w"]), col(params["c2_b"]),
        conv_w(params["p_w"]), col(params["p_b"]),
        psel,
    ]

    def tiled_spec(a):
        return pl.BlockSpec((1,) + a.shape[1:], lambda i: (i, 0, 0))

    def const_spec(a):
        nd = a.ndim
        return pl.BlockSpec(a.shape, lambda i, nd=nd: (0,) * nd)

    in_specs = [tiled_spec(a) for a in inputs[:3]] + [const_spec(a) for a in inputs[3:]]

    out_shape = (
        jax.ShapeDtypeStruct((n_tiles, out_c, n_out), f32),   # pooled (batch on lanes)
        jax.ShapeDtypeStruct((n_tiles, in_c, N), f32),        # skip (batch on lanes, padded)
    )
    out_specs = (
        pl.BlockSpec((1, out_c, n_out), lambda i: (i, 0, 0)),
        pl.BlockSpec((1, in_c, N), lambda i: (i, 0, 0)),
    )

    conv_flops = 2 * n_tiles * N * k * (in_c * c1 + in_c * in_c + out_c * in_c)
    sel_flops = 2 * n_tiles * N * n_out * out_c
    gn_flops = 8 * n_tiles * N * (c1 + in_c)
    cost = pl.CostEstimate(
        flops=int(conv_flops + sel_flops + gn_flops),
        transcendentals=int(n_tiles * N * (c1 + in_c)),
        bytes_accessed=int(sum(a.size * a.dtype.itemsize for a in inputs)
                           + 4 * (n_tiles * out_c * n_out + n_tiles * in_c * N)),
    )

    kernel = functools.partial(
        encoder_block_kernel, k=k, in_c=in_c,
        inv_cnt1=1.0 / ((c1 // g1) * L), inv_cnt2=1.0 / ((in_c // g2) * L),
        mxu_dtype=mxu_dtype)

    pooled_cat, skip_cat = pl.pallas_call(
        kernel,
        grid=(n_tiles,),
        in_specs=in_specs,
        out_specs=out_specs,
        out_shape=out_shape,
        compiler_params=pltpu.CompilerParams(
            dimension_semantics=("parallel",),
            vmem_limit_bytes=32 * 1024 * 1024,
        ),
        cost_estimate=cost,
    )(*inputs)

    # un-fold batch from lanes (cheap XLA layout ops outside the kernel)
    skip = (skip_cat.reshape(n_tiles, in_c, bt, Lp)
            .transpose(0, 2, 1, 3).reshape(B, in_c, Lp)[:, :, pad:pad + L])
    pooled = (pooled_cat.reshape(n_tiles, out_c, bt, l_out)
              .transpose(0, 2, 1, 3).reshape(B, out_c, l_out))
    return pooled, skip


# ----------------------------- deterministic params --------------------------

def init_params(key, in_c, out_c, tc_c, t_c, cond_c, k):
    keys = jax.random.split(key, 18)
    c1 = in_c + tc_c

    def w(kk, shape, scale=0.1):
        return (scale * jax.random.normal(kk, shape)).astype(jnp.float32)

    return {
        "gn1_w": w(keys[0], (c1,)) + 1.0, "gn1_b": w(keys[1], (c1,)),
        "c1_w": w(keys[2], (in_c, c1, k)), "c1_b": w(keys[3], (in_c,)),
        "t_w1": w(keys[4], (t_c, 128)), "t_b1": w(keys[5], (128,)),
        "t_w2": w(keys[6], (128, 2 * in_c)), "t_b2": w(keys[7], (2 * in_c,)),
        "c_w1": w(keys[8], (cond_c, 128)), "c_b1": w(keys[9], (128,)),
        "c_w2": w(keys[10], (128, 2 * in_c)), "c_b2": w(keys[11], (2 * in_c,)),
        "gn2_w": w(keys[12], (in_c,)) + 1.0, "gn2_b": w(keys[13], (in_c,)),
        "c2_w": w(keys[14], (in_c, in_c, k)), "c2_b": w(keys[15], (in_c,)),
        "p_w": w(keys[16], (out_c, in_c, k)), "p_b": w(keys[17], (out_c,)),
    }


# ----------------------------- pure-JAX reference ----------------------------

def _ref_groupnorm(x, groups, w, b):
    B, C, L = x.shape
    xg = x.reshape(B, groups, (C // groups) * L)
    m = jnp.mean(xg, axis=-1, keepdims=True)
    v = jnp.mean((xg - m) ** 2, axis=-1, keepdims=True)
    xn = ((xg - m) * jax.lax.rsqrt(v + EPS)).reshape(B, C, L)
    return xn * w[None, :, None] + b[None, :, None]


def _ref_conv1d(x, w, b, stride, pad):
    y = jax.lax.conv_general_dilated(
        x, w, (stride,), [(pad, pad)], dimension_numbers=("NCH", "OIH", "NCH"))
    return y + b[None, :, None]


def ref_forward(x, time, cond, time_cond, p, k):
    in_c = x.shape[1]
    g1 = min(16, (in_c + time_cond.shape[1]) // 4)
    g2 = min(16, in_c // 4)
    silu = lambda v: v * jax.nn.sigmoid(v)

    res = x
    h = jnp.concatenate([x, time_cond], axis=1)
    h = silu(_ref_groupnorm(h, g1, p["gn1_w"], p["gn1_b"]))
    h = _ref_conv1d(h, p["c1_w"], p["c1_b"], 1, k // 2)

    t = silu(time @ p["t_w1"] + p["t_b1"]) @ p["t_w2"] + p["t_b2"]
    h = h * t[:, :in_c, None] + t[:, in_c:, None]
    c = silu(cond @ p["c_w1"] + p["c_b1"]) @ p["c_w2"] + p["c_b2"]
    h = h * c[:, :in_c, None] + c[:, in_c:, None]

    h = silu(_ref_groupnorm(h, g2, p["gn2_w"], p["gn2_b"]))
    h = _ref_conv1d(h, p["c2_w"], p["c2_b"], 1, k // 2)

    skip = h + res
    pooled = _ref_conv1d(skip, p["p_w"], p["p_b"], 2, k // 2)
    return pooled, skip


# ----------------------------- main -------------------------------------------

if __name__ == "__main__":
    B, in_c, out_c, L = 2, 8, 16, 16
    tc_c, t_c, cond_c, k = 4, 8, 8, 3

    key = jax.random.PRNGKey(0)
    kx, kt, kc, ktc, kp = jax.random.split(key, 5)
    x = jax.random.normal(kx, (B, in_c, L), jnp.float32)
    time = jax.random.normal(kt, (B, t_c), jnp.float32)
    cond = jax.random.normal(kc, (B, cond_c), jnp.float32)
    time_cond = jax.random.normal(ktc, (B, tc_c, L), jnp.float32)
    params = init_params(kp, in_c, out_c, tc_c, t_c, cond_c, k)

    ref_pooled, ref_skip = ref_forward(x, time, cond, time_cond, params, k)

    # fp32 MXU path (tight check; recommended on v5e)
    pooled, skip = encoder_block_1d(x, time, cond, time_cond, params,
                                    kernel_size=k, ratio=2)
    jax.block_until_ready((pooled, skip))
    assert pooled.shape == (B, out_c, L // 2) and skip.shape == (B, in_c, L)
    assert jnp.allclose(skip, ref_skip, atol=1e-3, rtol=1e-3), \
        f"skip mismatch: {jnp.max(jnp.abs(skip - ref_skip))}"
    assert jnp.allclose(pooled, ref_pooled, atol=1e-3, rtol=1e-3), \
        f"pooled mismatch: {jnp.max(jnp.abs(pooled - ref_pooled))}"

    # bf16-at-MXU path (recommended on v6e/v7x; fp32 accumulation) — sanity check
    pooled_bf, skip_bf = encoder_block_1d(x, time, cond, time_cond, params,
                                          kernel_size=k, ratio=2,
                                          mxu_dtype=jnp.bfloat16)
    jax.block_until_ready((pooled_bf, skip_bf))
    assert float(jnp.max(jnp.abs(skip_bf - ref_skip))) < 0.25, "bf16 skip sanity"
    assert float(jnp.max(jnp.abs(pooled_bf - ref_pooled))) < 0.25, "bf16 pooled sanity"

    print("KERNEL_OK")
</pallas_src>

<mosaic_0001>
module attributes {stable_mosaic.version = 11 : i64} {
  func.func @encoder_block_kernel(%arg0: i32, %arg1: memref<1x12x36xf32, #tpu.memory_space<vmem>>, %arg2: memref<1x8x2xf32, #tpu.memory_space<vmem>>, %arg3: memref<1x8x2xf32, #tpu.memory_space<vmem>>, %arg4: memref<1x36xf32, #tpu.memory_space<vmem>>, %arg5: memref<36x2xf32, #tpu.memory_space<vmem>>, %arg6: memref<2x36xf32, #tpu.memory_space<vmem>>, %arg7: memref<3x12xf32, #tpu.memory_space<vmem>>, %arg8: memref<12x3xf32, #tpu.memory_space<vmem>>, %arg9: memref<2x8xf32, #tpu.memory_space<vmem>>, %arg10: memref<8x2xf32, #tpu.memory_space<vmem>>, %arg11: memref<12x1xf32, #tpu.memory_space<vmem>>, %arg12: memref<12x1xf32, #tpu.memory_space<vmem>>, %arg13: memref<8x36xf32, #tpu.memory_space<vmem>>, %arg14: memref<8x1xf32, #tpu.memory_space<vmem>>, %arg15: memref<8x1xf32, #tpu.memory_space<vmem>>, %arg16: memref<8x1xf32, #tpu.memory_space<vmem>>, %arg17: memref<8x24xf32, #tpu.memory_space<vmem>>, %arg18: memref<8x1xf32, #tpu.memory_space<vmem>>, %arg19: memref<16x24xf32, #tpu.memory_space<vmem>>, %arg20: memref<16x1xf32, #tpu.memory_space<vmem>>, %arg21: memref<36x16xf32, #tpu.memory_space<vmem>>, %arg22: memref<1x16x16xf32, #tpu.memory_space<vmem>>, %arg23: memref<1x8x36xf32, #tpu.memory_space<vmem>>) attributes {dimension_semantics = [#tpu.dimension_semantics<parallel>], iteration_bounds = array<i64: 1>, scalar_prefetch = 0 : i64, scratch_operands = 0 : i64, tpu.core_type = #tpu.core_type<tc>, window_params = [{transform_indices = @transform_0, window_bounds = array<i64: 1, 12, 36>}, {transform_indices = @transform_1, window_bounds = array<i64: 1, 8, 2>}, {transform_indices = @transform_2, window_bounds = array<i64: 1, 8, 2>}, {pipeline_mode = #tpu.pipeline_mode<synchronous>, transform_indices = @transform_3, window_bounds = array<i64: 1, 36>}, {pipeline_mode = #tpu.pipeline_mode<synchronous>, transform_indices = @transform_4, window_bounds = array<i64: 36, 2>}, {pipeline_mode = #tpu.pipeline_mode<synchronous>, transform_indices = @transform_5, window_bounds = array<i64: 2, 36>}, {pipeline_mode = #tpu.pipeline_mode<synchronous>, transform_indices = @transform_6, window_bounds = array<i64: 3, 12>}, {pipeline_mode = #tpu.pipeline_mode<synchronous>, transform_indices = @transform_7, window_bounds = array<i64: 12, 3>}, {pipeline_mode = #tpu.pipeline_mode<synchronous>, transform_indices = @transform_8, window_bounds = array<i64: 2, 8>}, {pipeline_mode = #tpu.pipeline_mode<synchronous>, transform_indices = @transform_9, window_bounds = array<i64: 8, 2>}, {pipeline_mode = #tpu.pipeline_mode<synchronous>, transform_indices = @transform_10, window_bounds = array<i64: 12, 1>}, {pipeline_mode = #tpu.pipeline_mode<synchronous>, transform_indices = @transform_11, window_bounds = array<i64: 12, 1>}, {pipeline_mode = #tpu.pipeline_mode<synchronous>, transform_indices = @transform_12, window_bounds = array<i64: 8, 36>}, {pipeline_mode = #tpu.pipeline_mode<synchronous>, transform_indices = @transform_13, window_bounds = array<i64: 8, 1>}, {pipeline_mode = #tpu.pipeline_mode<synchronous>, transform_indices = @transform_14, window_bounds = array<i64: 8, 1>}, {pipeline_mode = #tpu.pipeline_mode<synchronous>, transform_indices = @transform_15, window_bounds = array<i64: 8, 1>}, {pipeline_mode = #tpu.pipeline_mode<synchronous>, transform_indices = @transform_16, window_bounds = array<i64: 8, 24>}, {pipeline_mode = #tpu.pipeline_mode<synchronous>, transform_indices = @transform_17, window_bounds = array<i64: 8, 1>}, {pipeline_mode = #tpu.pipeline_mode<synchronous>, transform_indices = @transform_18, window_bounds = array<i64: 16, 24>}, {pipeline_mode = #tpu.pipeline_mode<synchronous>, transform_indices = @transform_19, window_bounds = array<i64: 16, 1>}, {pipeline_mode = #tpu.pipeline_mode<synchronous>, transform_indices = @transform_20, window_bounds = array<i64: 36, 16>}, {transform_indices = @transform_21, window_bounds = array<i64: 1, 16, 16>}, {transform_indices = @transform_22, window_bounds = array<i64: 1, 8, 36>}]} {
    %c0 = arith.constant 0 : index
    %c0_0 = arith.constant 0 : index
    %c0_1 = arith.constant 0 : index
    %0 = vector.load %arg1[%c0, %c0_0, %c0_1] : memref<1x12x36xf32, #tpu.memory_space<vmem>>, vector<1x12x36xf32>
    %1 = vector.shape_cast %0 : vector<1x12x36xf32> to vector<12x36xf32>
    %c0_2 = arith.constant 0 : index
    %c0_3 = arith.constant 0 : index
    %2 = vector.load %arg4[%c0_2, %c0_3] : memref<1x36xf32, #tpu.memory_space<vmem>>, vector<1x36xf32>
    %c0_4 = arith.constant 0 : index
    %c0_5 = arith.constant 0 : index
    %3 = vector.load %arg5[%c0_4, %c0_5] : memref<36x2xf32, #tpu.memory_space<vmem>>, vector<36x2xf32>
    %c0_6 = arith.constant 0 : index
    %c0_7 = arith.constant 0 : index
    %4 = vector.load %arg6[%c0_6, %c0_7] : memref<2x36xf32, #tpu.memory_space<vmem>>, vector<2x36xf32>
    %5 = vector.extract_strided_slice %1 {offsets = [0, 0], sizes = [8, 36], strides = [1, 1]} : vector<12x36xf32> to vector<8x36xf32>
    %c0_8 = arith.constant 0 : index
    %c0_9 = arith.constant 0 : index
    %6 = vector.load %arg7[%c0_8, %c0_9] : memref<3x12xf32, #tpu.memory_space<vmem>>, vector<3x12xf32>
    %c0_10 = arith.constant 0 : index
    %c0_11 = arith.constant 0 : index
    %7 = vector.load %arg8[%c0_10, %c0_11] : memref<12x3xf32, #tpu.memory_space<vmem>>, vector<12x3xf32>
    %c0_12 = arith.constant 0 : index
    %c0_13 = arith.constant 0 : index
    %8 = vector.load %arg11[%c0_12, %c0_13] : memref<12x1xf32, #tpu.memory_space<vmem>>, vector<12x1xf32>
    %c0_14 = arith.constant 0 : index
    %c0_15 = arith.constant 0 : index
    %9 = vector.load %arg12[%c0_14, %c0_15] : memref<12x1xf32, #tpu.memory_space<vmem>>, vector<12x1xf32>
    %cst = arith.constant dense<0.000000e+00> : vector<12x2xf32>
    %10 = tpu.matmul %1, %3, %cst {dimension_numbers = #tpu.dot_dimension_numbers<[1], [0], [0], [1], [0, 0, 1, 1], [], []>} : vector<12x36xf32>, vector<36x2xf32>, vector<12x2xf32> -> vector<12x2xf32>
    %11 = arith.mulf %1, %1 : vector<12x36xf32>
    %cst_16 = arith.constant dense<0.000000e+00> : vector<12x2xf32>
    %12 = tpu.matmul %11, %3, %cst_16 {dimension_numbers = #tpu.dot_dimension_numbers<[1], [0], [0], [1], [0, 0, 1, 1], [], []>} : vector<12x36xf32>, vector<36x2xf32>, vector<12x2xf32> -> vector<12x2xf32>
    %cst_17 = arith.constant dense<0.000000e+00> : vector<3x2xf32>
    %13 = tpu.matmul %6, %10, %cst_17 {dimension_numbers = #tpu.dot_dimension_numbers<[1], [0], [0], [1], [0, 0, 1, 1], [], []>} : vector<3x12xf32>, vector<12x2xf32>, vector<3x2xf32> -> vector<3x2xf32>
    %cst_18 = arith.constant 1.562500e-02 : f32
    %14 = vector.broadcast %cst_18 : f32 to vector<3x2xf32>
    %15 = arith.mulf %13, %14 : vector<3x2xf32>
    %cst_19 = arith.constant dense<0.000000e+00> : vector<3x2xf32>
    %16 = tpu.matmul %6, %12, %cst_19 {dimension_numbers = #tpu.dot_dimension_numbers<[1], [0], [0], [1], [0, 0, 1, 1], [], []>} : vector<3x12xf32>, vector<12x2xf32>, vector<3x2xf32> -> vector<3x2xf32>
    %cst_20 = arith.constant 1.562500e-02 : f32
    %17 = vector.broadcast %cst_20 : f32 to vector<3x2xf32>
    %18 = arith.mulf %16, %17 : vector<3x2xf32>
    %19 = arith.mulf %15, %15 : vector<3x2xf32>
    %20 = arith.subf %18, %19 : vector<3x2xf32>
    %cst_21 = arith.constant 9.99999974E-6 : f32
    %21 = vector.broadcast %cst_21 : f32 to vector<3x2xf32>
    %22 = arith.addf %20, %21 : vector<3x2xf32>
    %23 = math.rsqrt %22 : vector<3x2xf32>
    %cst_22 = arith.constant dense<0.000000e+00> : vector<12x2xf32>
    %24 = tpu.matmul %7, %15, %cst_22 {dimension_numbers = #tpu.dot_dimension_numbers<[1], [0], [0], [1], [0, 0, 1, 1], [], []>} : vector<12x3xf32>, vector<3x2xf32>, vector<12x2xf32> -> vector<12x2xf32>
    %cst_23 = arith.constant dense<0.000000e+00> : vector<12x36xf32>
    %25 = tpu.matmul %24, %4, %cst_23 {dimension_numbers = #tpu.dot_dimension_numbers<[1], [0], [0], [1], [0, 0, 1, 1], [], []>} : vector<12x2xf32>, vector<2x36xf32>, vector<12x36xf32> -> vector<12x36xf32>
    %cst_24 = arith.constant dense<0.000000e+00> : vector<12x2xf32>
    %26 = tpu.matmul %7, %23, %cst_24 {dimension_numbers = #tpu.dot_dimension_numbers<[1], [0], [0], [1], [0, 0, 1, 1], [], []>} : vector<12x3xf32>, vector<3x2xf32>, vector<12x2xf32> -> vector<12x2xf32>
    %cst_25 = arith.constant dense<0.000000e+00> : vector<12x36xf32>
    %27 = tpu.matmul %26, %4, %cst_25 {dimension_numbers = #tpu.dot_dimension_numbers<[1], [0], [0], [1], [0, 0, 1, 1], [], []>} : vector<12x2xf32>, vector<2x36xf32>, vector<12x36xf32> -> vector<12x36xf32>
    %28 = arith.subf %1, %25 : vector<12x36xf32>
    %29 = arith.mulf %28, %27 : vector<12x36xf32>
    %30 = vector.broadcast %8 : vector<12x1xf32> to vector<12x36xf32>
    %31 = arith.mulf %29, %30 : vector<12x36xf32>
    %32 = vector.broadcast %9 : vector<12x1xf32> to vector<12x36xf32>
    %33 = arith.addf %31, %32 : vector<12x36xf32>
    %34 = arith.negf %33 : vector<12x36xf32>
    %35 = math.exp %34 : vector<12x36xf32>
    %cst_26 = arith.constant 1.000000e+00 : f32
    %36 = vector.broadcast %cst_26 : f32 to vector<12x36xf32>
    %37 = arith.addf %36, %35 : vector<12x36xf32>
    %38 = arith.divf %36, %37 : vector<12x36xf32>
    %39 = arith.mulf %33, %38 : vector<12x36xf32>
    %40 = vector.broadcast %2 : vector<1x36xf32> to vector<12x36xf32>
    %41 = arith.mulf %39, %40 : vector<12x36xf32>
    %cst_27 = arith.constant 0.000000e+00 : f32
    %42 = vector.broadcast %cst_27 : f32 to vector<12x1xf32>
    %43 = tpu.concatenate %42, %41, %42 in 1 : vector<12x1xf32>, vector<12x36xf32>, vector<12x1xf32> -> vector<12x38xf32>
    %44 = vector.extract_strided_slice %43 {offsets = [0, 0], sizes = [12, 36], strides = [1, 1]} : vector<12x38xf32> to vector<12x36xf32>
    %45 = vector.extract_strided_slice %43 {offsets = [0, 1], sizes = [12, 36], strides = [1, 1]} : vector<12x38xf32> to vector<12x36xf32>
    %46 = vector.extract_strided_slice %43 {offsets = [0, 2], sizes = [12, 36], strides = [1, 1]} : vector<12x38xf32> to vector<12x36xf32>
    %47 = tpu.concatenate %44, %45, %46 in 0 : vector<12x36xf32>, vector<12x36xf32>, vector<12x36xf32> -> vector<36x36xf32>
    %c0_28 = arith.constant 0 : index
    %c0_29 = arith.constant 0 : index
    %48 = vector.load %arg13[%c0_28, %c0_29] : memref<8x36xf32, #tpu.memory_space<vmem>>, vector<8x36xf32>
    %cst_30 = arith.constant dense<0.000000e+00> : vector<8x36xf32>
    %49 = tpu.matmul %48, %47, %cst_30 {dimension_numbers = #tpu.dot_dimension_numbers<[1], [0], [0], [1], [0, 0, 1, 1], [], []>} : vector<8x36xf32>, vector<36x36xf32>, vector<8x36xf32> -> vector<8x36xf32>
    %c0_31 = arith.constant 0 : index
    %c0_32 = arith.constant 0 : index
    %50 = vector.load %arg14[%c0_31, %c0_32] : memref<8x1xf32, #tpu.memory_space<vmem>>, vector<8x1xf32>
    %51 = vector.broadcast %50 : vector<8x1xf32> to vector<8x36xf32>
    %52 = arith.addf %49, %51 : vector<8x36xf32>
    %c0_33 = arith.constant 0 : index
    %c0_34 = arith.constant 0 : index
    %c0_35 = arith.constant 0 : index
    %53 = vector.load %arg2[%c0_33, %c0_34, %c0_35] : memref<1x8x2xf32, #tpu.memory_space<vmem>>, vector<1x8x2xf32>
    %54 = vector.shape_cast %53 : vector<1x8x2xf32> to vector<8x2xf32>
    %cst_36 = arith.constant dense<0.000000e+00> : vector<8x36xf32>
    %55 = tpu.matmul %54, %4, %cst_36 {dimension_numbers = #tpu.dot_dimension_numbers<[1], [0], [0], [1], [0, 0, 1, 1], [], []>} : vector<8x2xf32>, vector<2x36xf32>, vector<8x36xf32> -> vector<8x36xf32>
    %c0_37 = arith.constant 0 : index
    %c0_38 = arith.constant 0 : index
    %c0_39 = arith.constant 0 : index
    %56 = vector.load %arg3[%c0_37, %c0_38, %c0_39] : memref<1x8x2xf32, #tpu.memory_space<vmem>>, vector<1x8x2xf32>
    %57 = vector.shape_cast %56 : vector<1x8x2xf32> to vector<8x2xf32>
    %cst_40 = arith.constant dense<0.000000e+00> : vector<8x36xf32>
    %58 = tpu.matmul %57, %4, %cst_40 {dimension_numbers = #tpu.dot_dimension_numbers<[1], [0], [0], [1], [0, 0, 1, 1], [], []>} : vector<8x2xf32>, vector<2x36xf32>, vector<8x36xf32> -> vector<8x36xf32>
    %59 = arith.mulf %52, %55 : vector<8x36xf32>
    %60 = arith.addf %59, %58 : vector<8x36xf32>
    %61 = vector.broadcast %2 : vector<1x36xf32> to vector<8x36xf32>
    %62 = arith.mulf %60, %61 : vector<8x36xf32>
    %c0_41 = arith.constant 0 : index
    %c0_42 = arith.constant 0 : index
    %63 = vector.load %arg9[%c0_41, %c0_42] : memref<2x8xf32, #tpu.memory_space<vmem>>, vector<2x8xf32>
    %c0_43 = arith.constant 0 : index
    %c0_44 = arith.constant 0 : index
    %64 = vector.load %arg10[%c0_43, %c0_44] : memref<8x2xf32, #tpu.memory_space<vmem>>, vector<8x2xf32>
    %c0_45 = arith.constant 0 : index
    %c0_46 = arith.constant 0 : index
    %65 = vector.load %arg15[%c0_45, %c0_46] : memref<8x1xf32, #tpu.memory_space<vmem>>, vector<8x1xf32>
    %c0_47 = arith.constant 0 : index
    %c0_48 = arith.constant 0 : index
    %66 = vector.load %arg16[%c0_47, %c0_48] : memref<8x1xf32, #tpu.memory_space<vmem>>, vector<8x1xf32>
    %cst_49 = arith.constant dense<0.000000e+00> : vector<8x2xf32>
    %67 = tpu.matmul %62, %3, %cst_49 {dimension_numbers = #tpu.dot_dimension_numbers<[1], [0], [0], [1], [0, 0, 1, 1], [], []>} : vector<8x36xf32>, vector<36x2xf32>, vector<8x2xf32> -> vector<8x2xf32>
    %68 = arith.mulf %62, %62 : vector<8x36xf32>
    %cst_50 = arith.constant dense<0.000000e+00> : vector<8x2xf32>
    %69 = tpu.matmul %68, %3, %cst_50 {dimension_numbers = #tpu.dot_dimension_numbers<[1], [0], [0], [1], [0, 0, 1, 1], [], []>} : vector<8x36xf32>, vector<36x2xf32>, vector<8x2xf32> -> vector<8x2xf32>
    %cst_51 = arith.constant dense<0.000000e+00> : vector<2x2xf32>
    %70 = tpu.matmul %63, %67, %cst_51 {dimension_numbers = #tpu.dot_dimension_numbers<[1], [0], [0], [1], [0, 0, 1, 1], [], []>} : vector<2x8xf32>, vector<8x2xf32>, vector<2x2xf32> -> vector<2x2xf32>
    %cst_52 = arith.constant 1.562500e-02 : f32
    %71 = vector.broadcast %cst_52 : f32 to vector<2x2xf32>
    %72 = arith.mulf %70, %71 : vector<2x2xf32>
    %cst_53 = arith.constant dense<0.000000e+00> : vector<2x2xf32>
    %73 = tpu.matmul %63, %69, %cst_53 {dimension_numbers = #tpu.dot_dimension_numbers<[1], [0], [0], [1], [0, 0, 1, 1], [], []>} : vector<2x8xf32>, vector<8x2xf32>, vector<2x2xf32> -> vector<2x2xf32>
    %cst_54 = arith.constant 1.562500e-02 : f32
    %74 = vector.broadcast %cst_54 : f32 to vector<2x2xf32>
    %75 = arith.mulf %73, %74 : vector<2x2xf32>
    %76 = arith.mulf %72, %72 : vector<2x2xf32>
    %77 = arith.subf %75, %76 : vector<2x2xf32>
    %cst_55 = arith.constant 9.99999974E-6 : f32
    %78 = vector.broadcast %cst_55 : f32 to vector<2x2xf32>
    %79 = arith.addf %77, %78 : vector<2x2xf32>
    %80 = math.rsqrt %79 : vector<2x2xf32>
    %cst_56 = arith.constant dense<0.000000e+00> : vector<8x2xf32>
    %81 = tpu.matmul %64, %72, %cst_56 {dimension_numbers = #tpu.dot_dimension_numbers<[1], [0], [0], [1], [0, 0, 1, 1], [], []>} : vector<8x2xf32>, vector<2x2xf32>, vector<8x2xf32> -> vector<8x2xf32>
    %cst_57 = arith.constant dense<0.000000e+00> : vector<8x36xf32>
    %82 = tpu.matmul %81, %4, %cst_57 {dimension_numbers = #tpu.dot_dimension_numbers<[1], [0], [0], [1], [0, 0, 1, 1], [], []>} : vector<8x2xf32>, vector<2x36xf32>, vector<8x36xf32> -> vector<8x36xf32>
    %cst_58 = arith.constant dense<0.000000e+00> : vector<8x2xf32>
    %83 = tpu.matmul %64, %80, %cst_58 {dimension_numbers = #tpu.dot_dimension_numbers<[1], [0], [0], [1], [0, 0, 1, 1], [], []>} : vector<8x2xf32>, vector<2x2xf32>, vector<8x2xf32> -> vector<8x2xf32>
    %cst_59 = arith.constant dense<0.000000e+00> : vector<8x36xf32>
    %84 = tpu.matmul %83, %4, %cst_59 {dimension_numbers = #tpu.dot_dimension_numbers<[1], [0], [0], [1], [0, 0, 1, 1], [], []>} : vector<8x2xf32>, vector<2x36xf32>, vector<8x36xf32> -> vector<8x36xf32>
    %85 = arith.subf %60, %82 : vector<8x36xf32>
    %86 = arith.mulf %85, %84 : vector<8x36xf32>
    %87 = vector.broadcast %65 : vector<8x1xf32> to vector<8x36xf32>
    %88 = arith.mulf %86, %87 : vector<8x36xf32>
    %89 = vector.broadcast %66 : vector<8x1xf32> to vector<8x36xf32>
    %90 = arith.addf %88, %89 : vector<8x36xf32>
    %91 = arith.negf %90 : vector<8x36xf32>
    %92 = math.exp %91 : vector<8x36xf32>
    %cst_60 = arith.constant 1.000000e+00 : f32
    %93 = vector.broadcast %cst_60 : f32 to vector<8x36xf32>
    %94 = arith.addf %93, %92 : vector<8x36xf32>
    %95 = arith.divf %93, %94 : vector<8x36xf32>
    %96 = arith.mulf %90, %95 : vector<8x36xf32>
    %97 = vector.broadcast %2 : vector<1x36xf32> to vector<8x36xf32>
    %98 = arith.mulf %96, %97 : vector<8x36xf32>
    %cst_61 = arith.constant 0.000000e+00 : f32
    %99 = vector.broadcast %cst_61 : f32 to vector<8x1xf32>
    %100 = tpu.concatenate %99, %98, %99 in 1 : vector<8x1xf32>, vector<8x36xf32>, vector<8x1xf32> -> vector<8x38xf32>
    %101 = vector.extract_strided_slice %100 {offsets = [0, 0], sizes = [8, 36], strides = [1, 1]} : vector<8x38xf32> to vector<8x36xf32>
    %102 = vector.extract_strided_slice %100 {offsets = [0, 1], sizes = [8, 36], strides = [1, 1]} : vector<8x38xf32> to vector<8x36xf32>
    %103 = vector.extract_strided_slice %100 {offsets = [0, 2], sizes = [8, 36], strides = [1, 1]} : vector<8x38xf32> to vector<8x36xf32>
    %104 = tpu.concatenate %101, %102, %103 in 0 : vector<8x36xf32>, vector<8x36xf32>, vector<8x36xf32> -> vector<24x36xf32>
    %c0_62 = arith.constant 0 : index
    %c0_63 = arith.constant 0 : index
    %105 = vector.load %arg17[%c0_62, %c0_63] : memref<8x24xf32, #tpu.memory_space<vmem>>, vector<8x24xf32>
    %cst_64 = arith.constant dense<0.000000e+00> : vector<8x36xf32>
    %106 = tpu.matmul %105, %104, %cst_64 {dimension_numbers = #tpu.dot_dimension_numbers<[1], [0], [0], [1], [0, 0, 1, 1], [], []>} : vector<8x24xf32>, vector<24x36xf32>, vector<8x36xf32> -> vector<8x36xf32>
    %c0_65 = arith.constant 0 : index
    %c0_66 = arith.constant 0 : index
    %107 = vector.load %arg18[%c0_65, %c0_66] : memref<8x1xf32, #tpu.memory_space<vmem>>, vector<8x1xf32>
    %108 = vector.broadcast %107 : vector<8x1xf32> to vector<8x36xf32>
    %109 = arith.addf %106, %108 : vector<8x36xf32>
    %110 = arith.addf %109, %5 : vector<8x36xf32>
    %111 = vector.broadcast %2 : vector<1x36xf32> to vector<8x36xf32>
    %112 = arith.mulf %110, %111 : vector<8x36xf32>
    %c0_67 = arith.constant 0 : index
    %c0_68 = arith.constant 0 : index
    %c0_69 = arith.constant 0 : index
    %113 = vector.load %arg23[%c0_67, %c0_68, %c0_69] : memref<1x8x36xf32, #tpu.memory_space<vmem>>, vector<1x8x36xf32>
    %114 = vector.shape_cast %113 : vector<1x8x36xf32> to vector<8x36xf32>
    %115 = vector.shape_cast %112 : vector<8x36xf32> to vector<1x8x36xf32>
    tpu.vector_store %arg23[%c0_67, %c0_68, %c0_69], %115 {strides = array<i32>} : memref<1x8x36xf32, #tpu.memory_space<vmem>>, vector<1x8x36xf32>,
    %cst_70 = arith.constant 0.000000e+00 : f32
    %116 = vector.broadcast %cst_70 : f32 to vector<8x1xf32>
    %117 = tpu.concatenate %116, %112, %116 in 1 : vector<8x1xf32>, vector<8x36xf32>, vector<8x1xf32> -> vector<8x38xf32>
    %118 = vector.extract_strided_slice %117 {offsets = [0, 0], sizes = [8, 36], strides = [1, 1]} : vector<8x38xf32> to vector<8x36xf32>
    %119 = vector.extract_strided_slice %117 {offsets = [0, 1], sizes = [8, 36], strides = [1, 1]} : vector<8x38xf32> to vector<8x36xf32>
    %120 = vector.extract_strided_slice %117 {offsets = [0, 2], sizes = [8, 36], strides = [1, 1]} : vector<8x38xf32> to vector<8x36xf32>
    %121 = tpu.concatenate %118, %119, %120 in 0 : vector<8x36xf32>, vector<8x36xf32>, vector<8x36xf32> -> vector<24x36xf32>
    %c0_71 = arith.constant 0 : index
    %c0_72 = arith.constant 0 : index
    %122 = vector.load %arg19[%c0_71, %c0_72] : memref<16x24xf32, #tpu.memory_space<vmem>>, vector<16x24xf32>
    %cst_73 = arith.constant dense<0.000000e+00> : vector<16x36xf32>
    %123 = tpu.matmul %122, %121, %cst_73 {dimension_numbers = #tpu.dot_dimension_numbers<[1], [0], [0], [1], [0, 0, 1, 1], [], []>} : vector<16x24xf32>, vector<24x36xf32>, vector<16x36xf32> -> vector<16x36xf32>
    %c0_74 = arith.constant 0 : index
    %c0_75 = arith.constant 0 : index
    %124 = vector.load %arg21[%c0_74, %c0_75] : memref<36x16xf32, #tpu.memory_space<vmem>>, vector<36x16xf32>
    %cst_76 = arith.constant dense<0.000000e+00> : vector<16x16xf32>
    %125 = tpu.matmul %123, %124, %cst_76 {dimension_numbers = #tpu.dot_dimension_numbers<[1], [0], [0], [1], [0, 0, 1, 1], [], []>} : vector<16x36xf32>, vector<36x16xf32>, vector<16x16xf32> -> vector<16x16xf32>
    %c0_77 = arith.constant 0 : index
    %c0_78 = arith.constant 0 : index
    %126 = vector.load %arg20[%c0_77, %c0_78] : memref<16x1xf32, #tpu.memory_space<vmem>>, vector<16x1xf32>
    %127 = vector.broadcast %126 : vector<16x1xf32> to vector<16x16xf32>
    %128 = arith.addf %125, %127 : vector<16x16xf32>
    %c0_79 = arith.constant 0 : index
    %c0_80 = arith.constant 0 : index
    %c0_81 = arith.constant 0 : index
    %129 = vector.load %arg22[%c0_79, %c0_80, %c0_81] : memref<1x16x16xf32, #tpu.memory_space<vmem>>, vector<1x16x16xf32>
    %130 = vector.shape_cast %129 : vector<1x16x16xf32> to vector<16x16xf32>
    %131 = vector.shape_cast %128 : vector<16x16xf32> to vector<1x16x16xf32>
    tpu.vector_store %arg22[%c0_79, %c0_80, %c0_81], %131 {strides = array<i32>} : memref<1x16x16xf32, #tpu.memory_space<vmem>>, vector<1x16x16xf32>,
    return
  }
  func.func @transform_0(%arg0: i32) -> (i32, i32, i32) {
    %c0_i32 = arith.constant 0 : i32
    %c0_i32_0 = arith.constant 0 : i32
    %c0_i32_1 = arith.constant 0 : i32
    return %arg0, %c0_i32, %c0_i32_0 : i32, i32, i32
  }
  func.func @transform_1(%arg0: i32) -> (i32, i32, i32) {
    %c0_i32 = arith.constant 0 : i32
    %c0_i32_0 = arith.constant 0 : i32
    %c0_i32_1 = arith.constant 0 : i32
    return %arg0, %c0_i32, %c0_i32_0 : i32, i32, i32
  }
  func.func @transform_2(%arg0: i32) -> (i32, i32, i32) {
    %c0_i32 = arith.constant 0 : i32
    %c0_i32_0 = arith.constant 0 : i32
    %c0_i32_1 = arith.constant 0 : i32
    return %arg0, %c0_i32, %c0_i32_0 : i32, i32, i32
  }
  func.func @transform_3(%arg0: i32) -> (i32, i32) {
    %c0_i32 = arith.constant 0 : i32
    %c0_i32_0 = arith.constant 0 : i32
    %c0_i32_1 = arith.constant 0 : i32
    return %c0_i32, %c0_i32_0 : i32, i32
  }
  func.func @transform_4(%arg0: i32) -> (i32, i32) {
    %c0_i32 = arith.constant 0 : i32
    %c0_i32_0 = arith.constant 0 : i32
    %c0_i32_1 = arith.constant 0 : i32
    return %c0_i32, %c0_i32_0 : i32, i32
  }
  func.func @transform_5(%arg0: i32) -> (i32, i32) {
    %c0_i32 = arith.constant 0 : i32
    %c0_i32_0 = arith.constant 0 : i32
    %c0_i32_1 = arith.constant 0 : i32
    return %c0_i32, %c0_i32_0 : i32, i32
  }
  func.func @transform_6(%arg0: i32) -> (i32, i32) {
    %c0_i32 = arith.constant 0 : i32
    %c0_i32_0 = arith.constant 0 : i32
    %c0_i32_1 = arith.constant 0 : i32
    return %c0_i32, %c0_i32_0 : i32, i32
  }
  func.func @transform_7(%arg0: i32) -> (i32, i32) {
    %c0_i32 = arith.constant 0 : i32
    %c0_i32_0 = arith.constant 0 : i32
    %c0_i32_1 = arith.constant 0 : i32
    return %c0_i32, %c0_i32_0 : i32, i32
  }
  func.func @transform_8(%arg0: i32) -> (i32, i32) {
    %c0_i32 = arith.constant 0 : i32
    %c0_i32_0 = arith.constant 0 : i32
    %c0_i32_1 = arith.constant 0 : i32
    return %c0_i32, %c0_i32_0 : i32, i32
  }
  func.func @transform_9(%arg0: i32) -> (i32, i32) {
    %c0_i32 = arith.constant 0 : i32
    %c0_i32_0 = arith.constant 0 : i32
    %c0_i32_1 = arith.constant 0 : i32
    return %c0_i32, %c0_i32_0 : i32, i32
  }
  func.func @transform_10(%arg0: i32) -> (i32, i32) {
    %c0_i32 = arith.constant 0 : i32
    %c0_i32_0 = arith.constant 0 : i32
    %c0_i32_1 = arith.constant 0 : i32
    return %c0_i32, %c0_i32_0 : i32, i32
  }
  func.func @transform_11(%arg0: i32) -> (i32, i32) {
    %c0_i32 = arith.constant 0 : i32
    %c0_i32_0 = arith.constant 0 : i32
    %c0_i32_1 = arith.constant 0 : i32
    return %c0_i32, %c0_i32_0 : i32, i32
  }
  func.func @transform_12(%arg0: i32) -> (i32, i32) {
    %c0_i32 = arith.constant 0 : i32
    %c0_i32_0 = arith.constant 0 : i32
    %c0_i32_1 = arith.constant 0 : i32
    return %c0_i32, %c0_i32_0 : i32, i32
  }
  func.func @transform_13(%arg0: i32) -> (i32, i32) {
    %c0_i32 = arith.constant 0 : i32
    %c0_i32_0 = arith.constant 0 : i32
    %c0_i32_1 = arith.constant 0 : i32
    return %c0_i32, %c0_i32_0 : i32, i32
  }
  func.func @transform_14(%arg0: i32) -> (i32, i32) {
    %c0_i32 = arith.constant 0 : i32
    %c0_i32_0 = arith.constant 0 : i32
    %c0_i32_1 = arith.constant 0 : i32
    return %c0_i32, %c0_i32_0 : i32, i32
  }
  func.func @transform_15(%arg0: i32) -> (i32, i32) {
    %c0_i32 = arith.constant 0 : i32
    %c0_i32_0 = arith.constant 0 : i32
    %c0_i32_1 = arith.constant 0 : i32
    return %c0_i32, %c0_i32_0 : i32, i32
  }
  func.func @transform_16(%arg0: i32) -> (i32, i32) {
    %c0_i32 = arith.constant 0 : i32
    %c0_i32_0 = arith.constant 0 : i32
    %c0_i32_1 = arith.constant 0 : i32
    return %c0_i32, %c0_i32_0 : i32, i32
  }
  func.func @transform_17(%arg0: i32) -> (i32, i32) {
    %c0_i32 = arith.constant 0 : i32
    %c0_i32_0 = arith.constant 0 : i32
    %c0_i32_1 = arith.constant 0 : i32
    return %c0_i32, %c0_i32_0 : i32, i32
  }
  func.func @transform_18(%arg0: i32) -> (i32, i32) {
    %c0_i32 = arith.constant 0 : i32
    %c0_i32_0 = arith.constant 0 : i32
    %c0_i32_1 = arith.constant 0 : i32
    return %c0_i32, %c0_i32_0 : i32, i32
  }
  func.func @transform_19(%arg0: i32) -> (i32, i32) {
    %c0_i32 = arith.constant 0 : i32
    %c0_i32_0 = arith.constant 0 : i32
    %c0_i32_1 = arith.constant 0 : i32
    return %c0_i32, %c0_i32_0 : i32, i32
  }
  func.func @transform_20(%arg0: i32) -> (i32, i32) {
    %c0_i32 = arith.constant 0 : i32
    %c0_i32_0 = arith.constant 0 : i32
    %c0_i32_1 = arith.constant 0 : i32
    return %c0_i32, %c0_i32_0 : i32, i32
  }
  func.func @transform_21(%arg0: i32) -> (i32, i32, i32) {
    %c0_i32 = arith.constant 0 : i32
    %c0_i32_0 = arith.constant 0 : i32
    %c0_i32_1 = arith.constant 0 : i32
    return %arg0, %c0_i32, %c0_i32_0 : i32, i32, i32
  }
  func.func @transform_22(%arg0: i32) -> (i32, i32, i32) {
    %c0_i32 = arith.constant 0 : i32
    %c0_i32_0 = arith.constant 0 : i32
    %c0_i32_1 = arith.constant 0 : i32
    return %arg0, %c0_i32, %c0_i32_0 : i32, i32, i32
  }
}

</mosaic_0001>

<llo_original>
// kernel: tpu_custom_call.1
$region0: #{tpu_custom_call.1}
  #allocation0 [shape = 'u32[]', space=smem, size = 0x4, offset = 0x4, fixed_abs, tag = 'smem constant byte address 0x4 - core index']
  #allocation1 [shape = 'u32[144,128]{1,0:T(1,128)}', space=vmem, size = 0x12000, scoped, tag = 'internal scratch']
  %s0 = inlined_call_operand.vmem [shape: f32[1,12,36], index: 0, kind: input, shape index: {}]
  %s1 = inlined_call_operand.vmem [shape: f32[1,8,2], index: 1, kind: input, shape index: {}]
  %s2 = inlined_call_operand.vmem [shape: f32[1,8,2], index: 2, kind: input, shape index: {}]
  %s3 = inlined_call_operand.vmem [shape: f32[1,36], index: 3, kind: input, shape index: {}]
  %s4 = inlined_call_operand.vmem [shape: f32[36,2], index: 4, kind: input, shape index: {}]
  %s5 = inlined_call_operand.vmem [shape: f32[2,36], index: 5, kind: input, shape index: {}]
  %s6 = inlined_call_operand.vmem [shape: f32[3,12], index: 6, kind: input, shape index: {}]
  %s7 = inlined_call_operand.vmem [shape: f32[12,3], index: 7, kind: input, shape index: {}]
  %s8 = inlined_call_operand.vmem [shape: f32[2,8], index: 8, kind: input, shape index: {}]
  %s9 = inlined_call_operand.vmem [shape: f32[8,2], index: 9, kind: input, shape index: {}]
  %s10 = inlined_call_operand.vmem [shape: f32[12,1], index: 10, kind: input, shape index: {}]
  %s11 = inlined_call_operand.vmem [shape: f32[12,1], index: 11, kind: input, shape index: {}]
  %s12 = inlined_call_operand.vmem [shape: f32[8,36], index: 12, kind: input, shape index: {}]
  %s13 = inlined_call_operand.vmem [shape: f32[8,1], index: 13, kind: input, shape index: {}]
  %s14 = inlined_call_operand.vmem [shape: f32[8,1], index: 14, kind: input, shape index: {}]
  %s15 = inlined_call_operand.vmem [shape: f32[8,1], index: 15, kind: input, shape index: {}]
  %s16 = inlined_call_operand.vmem [shape: f32[8,24], index: 16, kind: input, shape index: {}]
  %s17 = inlined_call_operand.vmem [shape: f32[8,1], index: 17, kind: input, shape index: {}]
  %s18 = inlined_call_operand.vmem [shape: f32[16,24], index: 18, kind: input, shape index: {}]
  %s19 = inlined_call_operand.vmem [shape: f32[16,1], index: 19, kind: input, shape index: {}]
  %s20 = inlined_call_operand.vmem [shape: f32[36,16], index: 20, kind: input, shape index: {}]
  %s21 = inlined_call_operand.hbm [shape: f32[1,16,16], index: 21, kind: output, shape index: {0}]
  %s22 = inlined_call_operand.hbm [shape: f32[1,8,36], index: 22, kind: output, shape index: {1}]
  %23 = xla_tuple %s21, %s22
  %s24 = sld [smem:[#allocation0]]
  $region102: #{tpu_custom_call.1} parent=0
    _
  %s26 = ssub.s32 1, %s24
  %s27 = scalar_select 0, %s26, %s24
  $region1: #{tpu_custom_call.1} parent=0
    #allocation2 [shape = 'u8[8192]{0}', space=vmem, size = 0x2000, scoped, tag = 'output window, operand 0, single buffered']
    #allocation3 [shape = 's32[1]{0}', space=sflag, size = 0x4, scoped, tag = 'scoped memory for tpu_custom_call.1']
    #allocation4 [shape = 'u8[4096]{0}', space=vmem, size = 0x1000, scoped, tag = 'output window, operand 1, single buffered']
    #allocation5 [shape = 's32[1]{0}', space=sflag, size = 0x4, scoped, tag = 'scoped memory for tpu_custom_call.1']
    %28 = vsyncpa [#allocation3], 0
    %29 = vsyncpa [#allocation5], 0
    // Predicated region
    $region2: #{tpu_custom_call.1} parent=1 // pred_check
      _
    $region3: #{tpu_custom_call.1} parent=1 // pred_check_branch
      %31 = sbr.rel (0) target = $region5
    $region4: #{tpu_custom_call.1} parent=1 // pred_region
      _
    $region5: #{tpu_custom_call.1} parent=1 // pred_fallthru
      _
    // Predicated region
    $region6: #{tpu_custom_call.1} parent=1 // pred_check
      _
    $region7: #{tpu_custom_call.1} parent=1 // pred_check_branch
      %33 = sbr.rel (0) target = $region9
    $region8: #{tpu_custom_call.1} parent=1 // pred_region
      _
    $region9: #{tpu_custom_call.1} parent=1 // pred_fallthru
      _
    // Predicated region
    $region10: #{tpu_custom_call.1} parent=1 // pred_check
      _
    $region11: #{tpu_custom_call.1} parent=1 // pred_check_branch
      %35 = sbr.rel (0) target = $region13
    $region12: #{tpu_custom_call.1} parent=1 // pred_region
      _
    $region13: #{tpu_custom_call.1} parent=1 // pred_fallthru
      _
    // Predicated region
    $region14: #{tpu_custom_call.1} parent=1 // pred_check
      _
    $region15: #{tpu_custom_call.1} parent=1 // pred_check_branch
      %37 = sbr.rel (0) target = $region17
    $region16: #{tpu_custom_call.1} parent=1 // pred_region
      _
    $region17: #{tpu_custom_call.1} parent=1 // pred_fallthru
      _
    // Predicated region
    $region18: #{tpu_custom_call.1} parent=1 // pred_check
      _
    $region19: #{tpu_custom_call.1} parent=1 // pred_check_branch
      %39 = sbr.rel (0) target = $region21
    $region20: #{tpu_custom_call.1} parent=1 // pred_region
      _
    $region21: #{tpu_custom_call.1} parent=1 // pred_fallthru
      _
    // Predicated region
    $region22: #{tpu_custom_call.1} parent=1 // pred_check
      _
    $region23: #{tpu_custom_call.1} parent=1 // pred_check_branch
      %41 = sbr.rel (0) target = $region25
    $region24: #{tpu_custom_call.1} parent=1 // pred_region
      _
    $region25: #{tpu_custom_call.1} parent=1 // pred_fallthru
      _
    // Predicated region
    $region26: #{tpu_custom_call.1} parent=1 // pred_check
      _
    $region27: #{tpu_custom_call.1} parent=1 // pred_check_branch
      %43 = sbr.rel (0) target = $region29
    $region28: #{tpu_custom_call.1} parent=1 // pred_region
      _
    $region29: #{tpu_custom_call.1} parent=1 // pred_fallthru
      _
    // Predicated region
    $region30: #{tpu_custom_call.1} parent=1 // pred_check
      _
    $region31: #{tpu_custom_call.1} parent=1 // pred_check_branch
      %45 = sbr.rel (0) target = $region33
    $region32: #{tpu_custom_call.1} parent=1 // pred_region
      _
    $region33: #{tpu_custom_call.1} parent=1 // pred_fallthru
      _
    // Predicated region
    $region34: #{tpu_custom_call.1} parent=1 // pred_check
      _
    $region35: #{tpu_custom_call.1} parent=1 // pred_check_branch
      %47 = sbr.rel (0) target = $region37
    $region36: #{tpu_custom_call.1} parent=1 // pred_region
      _
    $region37: #{tpu_custom_call.1} parent=1 // pred_fallthru
      _
    // Predicated region
    $region38: #{tpu_custom_call.1} parent=1 // pred_check
      _
    $region39: #{tpu_custom_call.1} parent=1 // pred_check_branch
      %49 = sbr.rel (0) target = $region41
    $region40: #{tpu_custom_call.1} parent=1 // pred_region
      _
    $region41: #{tpu_custom_call.1} parent=1 // pred_fallthru
      _
    // Predicated region
    $region42: #{tpu_custom_call.1} parent=1 // pred_check
      _
    $region43: #{tpu_custom_call.1} parent=1 // pred_check_branch
      %51 = sbr.rel (0) target = $region45
    $region44: #{tpu_custom_call.1} parent=1 // pred_region
      _
    $region45: #{tpu_custom_call.1} parent=1 // pred_fallthru
      _
    // Predicated region
    $region46: #{tpu_custom_call.1} parent=1 // pred_check
      _
    $region47: #{tpu_custom_call.1} parent=1 // pred_check_branch
      %53 = sbr.rel (0) target = $region49
    $region48: #{tpu_custom_call.1} parent=1 // pred_region
      _
    $region49: #{tpu_custom_call.1} parent=1 // pred_fallthru
      _
    // Predicated region
    $region50: #{tpu_custom_call.1} parent=1 // pred_check
      _
    $region51: #{tpu_custom_call.1} parent=1 // pred_check_branch
      %55 = sbr.rel (0) target = $region53
    $region52: #{tpu_custom_call.1} parent=1 // pred_region
      _
    $region53: #{tpu_custom_call.1} parent=1 // pred_fallthru
      _
    // Predicated region
    $region54: #{tpu_custom_call.1} parent=1 // pred_check
      _
    $region55: #{tpu_custom_call.1} parent=1 // pred_check_branch
      %57 = sbr.rel (0) target = $region57
    $region56: #{tpu_custom_call.1} parent=1 // pred_region
      _
    $region57: #{tpu_custom_call.1} parent=1 // pred_fallthru
      _
    // Predicated region
    $region58: #{tpu_custom_call.1} parent=1 // pred_check
      _
    $region59: #{tpu_custom_call.1} parent=1 // pred_check_branch
      %59 = sbr.rel (0) target = $region61
    $region60: #{tpu_custom_call.1} parent=1 // pred_region
      _
    $region61: #{tpu_custom_call.1} parent=1 // pred_fallthru
      _
    // Predicated region
    $region62: #{tpu_custom_call.1} parent=1 // pred_check
      _
    $region63: #{tpu_custom_call.1} parent=1 // pred_check_branch
      %61 = sbr.rel (0) target = $region65
    $region64: #{tpu_custom_call.1} parent=1 // pred_region
      _
    $region65: #{tpu_custom_call.1} parent=1 // pred_fallthru
      _
    // Predicated region
    $region66: #{tpu_custom_call.1} parent=1 // pred_check
      _
    $region67: #{tpu_custom_call.1} parent=1 // pred_check_branch
      %63 = sbr.rel (0) target = $region69
    $region68: #{tpu_custom_call.1} parent=1 // pred_region
      _
    $region69: #{tpu_custom_call.1} parent=1 // pred_fallthru
      _
    // Predicated region
    $region70: #{tpu_custom_call.1} parent=1 // pred_check
      _
    $region71: #{tpu_custom_call.1} parent=1 // pred_check_branch
      %65 = sbr.rel (0) target = $region73
    $region72: #{tpu_custom_call.1} parent=1 // pred_region
      _
    $region73: #{tpu_custom_call.1} parent=1 // pred_fallthru
      _
    // Predicated region
    $region74: #{tpu_custom_call.1} parent=1 // pred_check
      _
    $region75: #{tpu_custom_call.1} parent=1 // pred_check_branch
      %67 = sbr.rel (0) target = $region77
    $region76: #{tpu_custom_call.1} parent=1 // pred_region
      _
    $region77: #{tpu_custom_call.1} parent=1 // pred_fallthru
      _
    // Predicated region
    $region78: #{tpu_custom_call.1} parent=1 // pred_check
      _
    $region79: #{tpu_custom_call.1} parent=1 // pred_check_branch
      %69 = sbr.rel (0) target = $region81
    $region80: #{tpu_custom_call.1} parent=1 // pred_region
      _
    $region81: #{tpu_custom_call.1} parent=1 // pred_fallthru
      _
    // Predicated region
    $region82: #{tpu_custom_call.1} parent=1 // pred_check
      _
    $region83: #{tpu_custom_call.1} parent=1 // pred_check_branch
      %71 = sbr.rel (0) target = $region85
    $region84: #{tpu_custom_call.1} parent=1 // pred_region
      _
    $region85: #{tpu_custom_call.1} parent=1 // pred_fallthru
      _
    %v72 = vld [vmem:[%s0] sm:$0xff]
    %v73 = vld [vmem:[%s0 + $0x8] sm:$0xf]
    %v74 = vld [vmem:[%s3] sm:$0x1]
    %v75 = vld [vmem:[%s4] sm:$0xff]
    %v76 = vld [vmem:[%s4 + $0x8] sm:$0xff]
    %v77 = vld [vmem:[%s4 + $0x10] sm:$0xff]
    %v78 = vld [vmem:[%s4 + $0x18] sm:$0xff]
    %v79 = vld [vmem:[%s4 + $0x20] sm:$0xf]
    %v80 = vld [vmem:[%s5] sm:$0x3]
    %v81 = vld [vmem:[%s6] sm:$0x7]
    %v82 = vld [vmem:[%s7] sm:$0xff]
    %v83 = vld [vmem:[%s7 + $0x8] sm:$0xf]
    %v84 = vld [vmem:[%s10] sm:$0xff]
    %v85 = vld [vmem:[%s10 + $0x8] sm:$0xf]
    %v86 = vld [vmem:[%s11] sm:$0xff]
    %v87 = vld [vmem:[%s11 + $0x8] sm:$0xf]
    %vm88 = vcmask 293888
    %v90 = vsel %vm88, %v72, 0
    %v93 = vsel %vm88, %v73, 0
    %vm95 = vcmask 1043456
    %v97 = vsel %vm95, %v79, 0
    %99 = vmatprep.subr.mxu0 0.0
    %100 = vmatpush1.msra.mxu0 0.0
    %101 = vmatprep.subr.mxu0 0.0
    %102 = vmatpush1.msra.mxu0 0.0
    %103 = vmatprep.subr.mxu0 0.0
    %104 = vmatpush1.msra.mxu0 0.0
    %105 = vmatprep.subr.mxu0 0.0
    %106 = vmatpush1.msra.mxu0 0.0
    %107 = vmatprep.subr.mxu0 0.0
    %108 = vmatpush1.msra.mxu0 0.0
    %109 = vmatprep.subr.mxu0 0.0
    %110 = vmatpush1.msra.mxu0 0.0
    %111 = vmatprep.subr.mxu0 0.0
    %112 = vmatpush1.msra.mxu0 0.0
    %113 = vmatprep.subr.mxu0 0.0
    %114 = vmatpush1.msra.mxu0 0.0
    %115 = vmatprep.subr.mxu0 0.0
    %116 = vmatpush1.msra.mxu0 0.0
    %117 = vmatprep.subr.mxu0 0.0
    %118 = vmatpush1.msra.mxu0 0.0
    %119 = vmatprep.subr.mxu0 0.0
    %120 = vmatpush1.msra.mxu0 0.0
    %121 = vmatprep.subr.mxu0 0.0
    %122 = vmatpush1.msra.mxu0 %v97
    %123 = vmatprep.subr.mxu0 0.0
    %124 = vmatpush1.msra.mxu0 %v78
    %125 = vmatprep.subr.mxu0 0.0
    %126 = vmatpush1.msra.mxu0 %v77
    %127 = vmatprep.subr.mxu0 0.0
    %128 = vmatpush1.msra.mxu0 %v76
    %129 = vmatprep.subr.mxu0 0.0
    %130 = vmatpush1.msra.mxu0 %v75
    %131 = vmatprep.subr.mxu0 0.0
    %132 = vmatpush2.msra.mxu0 0.0
    %133 = vmatprep.subr.mxu0 0.0
    %134 = vmatpush2.msra.mxu0 0.0
    %135 = vmatprep.subr.mxu0 0.0
    %136 = vmatpush2.msra.mxu0 0.0
    %137 = vmatprep.subr.mxu0 0.0
    %138 = vmatpush2.msra.mxu0 0.0
    %139 = vmatprep.subr.mxu0 0.0
    %140 = vmatpush2.msra.mxu0 0.0
    %141 = vmatprep.subr.mxu0 0.0
    %142 = vmatpush2.msra.mxu0 0.0
    %143 = vmatprep.subr.mxu0 0.0
    %144 = vmatpush2.msra.mxu0 0.0
    %145 = vmatprep.subr.mxu0 0.0
    %146 = vmatpush2.msra.mxu0 0.0
    %147 = vmatprep.subr.mxu0 0.0
    %148 = vmatpush2.msra.mxu0 0.0
    %149 = vmatprep.subr.mxu0 0.0
    %150 = vmatpush2.msra.mxu0 0.0
    %151 = vmatprep.subr.mxu0 0.0
    %152 = vmatpush2.msra.mxu0 0.0
    %153 = vmatprep.subr.mxu0 0.0
    %154 = vmatpush2.msra.mxu0 0.0
    %155 = vmatprep.subr.mxu0 0.0
    %156 = vmatpush2.msra.mxu0 0.0
    %157 = vmatprep.subr.mxu0 0.0
    %158 = vmatpush2.msra.mxu0 0.0
    %159 = vmatprep.subr.mxu0 0.0
    %160 = vmatpush2.msra.mxu0 0.0
    %161 = vmatprep.subr.mxu0 0.0
    %162 = vmatpush2.msra.mxu0 0.0
    %163 = vmatprep.mubr.f32.mxu0 0.0
    %164 = vmatmul.mubr.f32.gmra.mxu0 %v90
    %v165 = vpop.f32.mrf.mxu0
    %v166 = vadd.f32 0.0, %v165
    %v167 = vpop.f32.mrf.mxu0
    %168 = vmatprep.mubr.f32.mxu0 0.0
    %169 = vmatmul.mubr.f32.gmra.mxu0 %v93
    %v170 = vpop.f32.mrf.mxu0
    %v171 = vadd.f32 0.0, %v170
    %v172 = vpop.f32.mrf.mxu0
    %173 = vdwg.mxu0
    %v174 = vmul.f32 %v72, %v72
    %v175 = vmul.f32 %v73, %v73
    %v177 = vsel %vm88, %v174, 0
    %v180 = vsel %vm88, %v175, 0
    %182 = vmatprep.subr.mxu0 0.0
    %183 = vmatpush1.msra.mxu0 0.0
    %184 = vmatprep.subr.mxu0 0.0
    %185 = vmatpush1.msra.mxu0 0.0
    %186 = vmatprep.subr.mxu0 0.0
    %187 = vmatpush1.msra.mxu0 0.0
    %188 = vmatprep.subr.mxu0 0.0
    %189 = vmatpush1.msra.mxu0 0.0
    %190 = vmatprep.subr.mxu0 0.0
    %191 = vmatpush1.msra.mxu0 0.0
    %192 = vmatprep.subr.mxu0 0.0
    %193 = vmatpush1.msra.mxu0 0.0
    %194 = vmatprep.subr.mxu0 0.0
    %195 = vmatpush1.msra.mxu0 0.0
    %196 = vmatprep.subr.mxu0 0.0
    %197 = vmatpush1.msra.mxu0 0.0
    %198 = vmatprep.subr.mxu0 0.0
    %199 = vmatpush1.msra.mxu0 0.0
    %200 = vmatprep.subr.mxu0 0.0
    %201 = vmatpush1.msra.mxu0 0.0
    %202 = vmatprep.subr.mxu0 0.0
    %203 = vmatpush1.msra.mxu0 0.0
    %204 = vmatprep.subr.mxu0 0.0
    %205 = vmatpush1.msra.mxu0 %v97
    %206 = vmatprep.subr.mxu0 0.0
    %207 = vmatpush1.msra.mxu0 %v78
    %208 = vmatprep.subr.mxu0 0.0
    %209 = vmatpush1.msra.mxu0 %v77
    %210 = vmatprep.subr.mxu0 0.0
    %211 = vmatpush1.msra.mxu0 %v76
    %212 = vmatprep.subr.mxu0 0.0
    %213 = vmatpush1.msra.mxu0 %v75
    %214 = vmatprep.subr.mxu0 0.0
    %215 = vmatpush2.msra.mxu0 0.0
    %216 = vmatprep.subr.mxu0 0.0
    %217 = vmatpush2.msra.mxu0 0.0
    %218 = vmatprep.subr.mxu0 0.0
    %219 = vmatpush2.msra.mxu0 0.0
    %220 = vmatprep.subr.mxu0 0.0
    %221 = vmatpush2.msra.mxu0 0.0
    %222 = vmatprep.subr.mxu0 0.0
    %223 = vmatpush2.msra.mxu0 0.0
    %224 = vmatprep.subr.mxu0 0.0
    %225 = vmatpush2.msra.mxu0 0.0
    %226 = vmatprep.subr.mxu0 0.0
    %227 = vmatpush2.msra.mxu0 0.0
    %228 = vmatprep.subr.mxu0 0.0
    %229 = vmatpush2.msra.mxu0 0.0
    %230 = vmatprep.subr.mxu0 0.0
    %231 = vmatpush2.msra.mxu0 0.0
    %232 = vmatprep.subr.mxu0 0.0
    %233 = vmatpush2.msra.mxu0 0.0
    %234 = vmatprep.subr.mxu0 0.0
    %235 = vmatpush2.msra.mxu0 0.0
    %236 = vmatprep.subr.mxu0 0.0
    %237 = vmatpush2.msra.mxu0 0.0
    %238 = vmatprep.subr.mxu0 0.0
    %239 = vmatpush2.msra.mxu0 0.0
    %240 = vmatprep.subr.mxu0 0.0
    %241 = vmatpush2.msra.mxu0 0.0
    %242 = vmatprep.subr.mxu0 0.0
    %243 = vmatpush2.msra.mxu0 0.0
    %244 = vmatprep.subr.mxu0 0.0
    %245 = vmatpush2.msra.mxu0 0.0
    %246 = vmatprep.mubr.f32.mxu0 0.0
    %247 = vmatmul.mubr.f32.gmra.mxu0 %v177
    %v248 = vpop.f32.mrf.mxu0
    %v249 = vadd.f32 0.0, %v248
    %v250 = vpop.f32.mrf.mxu0
    %251 = vmatprep.mubr.f32.mxu0 0.0
    %252 = vmatmul.mubr.f32.gmra.mxu0 %v180
    %v253 = vpop.f32.mrf.mxu0
    %v254 = vadd.f32 0.0, %v253
    %v255 = vpop.f32.mrf.mxu0
    %256 = vdwg.mxu0
    %vm257 = vcmask 97280
    %v259 = vsel %vm257, %v81, 0
    %v262 = vsel %vm95, %v171, 0
    %264 = vmatprep.subr.mxu0 0.0
    %265 = vmatpush1.msra.mxu0 0.0
    %266 = vmatprep.subr.mxu0 0.0
    %267 = vmatpush1.msra.mxu0 0.0
    %268 = vmatprep.subr.mxu0 0.0
    %269 = vmatpush1.msra.mxu0 0.0
    %270 = vmatprep.subr.mxu0 0.0
    %271 = vmatpush1.msra.mxu0 0.0
    %272 = vmatprep.subr.mxu0 0.0
    %273 = vmatpush1.msra.mxu0 0.0
    %274 = vmatprep.subr.mxu0 0.0
    %275 = vmatpush1.msra.mxu0 0.0
    %276 = vmatprep.subr.mxu0 0.0
    %277 = vmatpush1.msra.mxu0 0.0
    %278 = vmatprep.subr.mxu0 0.0
    %279 = vmatpush1.msra.mxu0 0.0
    %280 = vmatprep.subr.mxu0 0.0
    %281 = vmatpush1.msra.mxu0 0.0
    %282 = vmatprep.subr.mxu0 0.0
    %283 = vmatpush1.msra.mxu0 0.0
    %284 = vmatprep.subr.mxu0 0.0
    %285 = vmatpush1.msra.mxu0 0.0
    %286 = vmatprep.subr.mxu0 0.0
    %287 = vmatpush1.msra.mxu0 0.0
    %288 = vmatprep.subr.mxu0 0.0
    %289 = vmatpush1.msra.mxu0 0.0
    %290 = vmatprep.subr.mxu0 0.0
    %291 = vmatpush1.msra.mxu0 0.0
    %292 = vmatprep.subr.mxu0 0.0
    %293 = vmatpush1.msra.mxu0 %v262
    %294 = vmatprep.subr.mxu0 0.0
    %295 = vmatpush1.msra.mxu0 %v166
    %296 = vmatprep.subr.mxu0 0.0
    %297 = vmatpush2.msra.mxu0 0.0
    %298 = vmatprep.subr.mxu0 0.0
    %299 = vmatpush2.msra.mxu0 0.0
    %300 = vmatprep.subr.mxu0 0.0
    %301 = vmatpush2.msra.mxu0 0.0
    %302 = vmatprep.subr.mxu0 0.0
    %303 = vmatpush2.msra.mxu0 0.0
    %304 = vmatprep.subr.mxu0 0.0
    %305 = vmatpush2.msra.mxu0 0.0
    %306 = vmatprep.subr.mxu0 0.0
    %307 = vmatpush2.msra.mxu0 0.0
    %308 = vmatprep.subr.mxu0 0.0
    %309 = vmatpush2.msra.mxu0 0.0
    %310 = vmatprep.subr.mxu0 0.0
    %311 = vmatpush2.msra.mxu0 0.0
    %312 = vmatprep.subr.mxu0 0.0
    %313 = vmatpush2.msra.mxu0 0.0
    %314 = vmatprep.subr.mxu0 0.0
    %315 = vmatpush2.msra.mxu0 0.0
    %316 = vmatprep.subr.mxu0 0.0
    %317 = vmatpush2.msra.mxu0 0.0
    %318 = vmatprep.subr.mxu0 0.0
    %319 = vmatpush2.msra.mxu0 0.0
    %320 = vmatprep.subr.mxu0 0.0
    %321 = vmatpush2.msra.mxu0 0.0
    %322 = vmatprep.subr.mxu0 0.0
    %323 = vmatpush2.msra.mxu0 0.0
    %324 = vmatprep.subr.mxu0 0.0
    %325 = vmatpush2.msra.mxu0 0.0
    %326 = vmatprep.subr.mxu0 0.0
    %327 = vmatpush2.msra.mxu0 0.0
    %328 = vmatprep.mubr.f32.mxu0 0.0
    %329 = vmatmul.mubr.f32.gmra.mxu0 %v259
    %v330 = vpop.f32.mrf.mxu0
    %v331 = vadd.f32 0.0, %v330
    %v332 = vpop.f32.mrf.mxu0
    %333 = vdwg.mxu0
    %v334 = vmul.f32 %v331, 0.015625
    %v336 = vsel %vm95, %v254, 0
    %338 = vmatprep.subr.mxu0 0.0
    %339 = vmatpush1.msra.mxu0 0.0
    %340 = vmatprep.subr.mxu0 0.0
    %341 = vmatpush1.msra.mxu0 0.0
    %342 = vmatprep.subr.mxu0 0.0
    %343 = vmatpush1.msra.mxu0 0.0
    %344 = vmatprep.subr.mxu0 0.0
    %345 = vmatpush1.msra.mxu0 0.0
    %346 = vmatprep.subr.mxu0 0.0
    %347 = vmatpush1.msra.mxu0 0.0
    %348 = vmatprep.subr.mxu0 0.0
    %349 = vmatpush1.msra.mxu0 0.0
    %350 = vmatprep.subr.mxu0 0.0
    %351 = vmatpush1.msra.mxu0 0.0
    %352 = vmatprep.subr.mxu0 0.0
    %353 = vmatpush1.msra.mxu0 0.0
    %354 = vmatprep.subr.mxu0 0.0
    %355 = vmatpush1.msra.mxu0 0.0
    %356 = vmatprep.subr.mxu0 0.0
    %357 = vmatpush1.msra.mxu0 0.0
    %358 = vmatprep.subr.mxu0 0.0
    %359 = vmatpush1.msra.mxu0 0.0
    %360 = vmatprep.subr.mxu0 0.0
    %361 = vmatpush1.msra.mxu0 0.0
    %362 = vmatprep.subr.mxu0 0.0
    %363 = vmatpush1.msra.mxu0 0.0
    %364 = vmatprep.subr.mxu0 0.0
    %365 = vmatpush1.msra.mxu0 0.0
    %366 = vmatprep.subr.mxu0 0.0
    %367 = vmatpush1.msra.mxu0 %v336
    %368 = vmatprep.subr.mxu0 0.0
    %369 = vmatpush1.msra.mxu0 %v249
    %370 = vmatprep.subr.mxu0 0.0
    %371 = vmatpush2.msra.mxu0 0.0
    %372 = vmatprep.subr.mxu0 0.0
    %373 = vmatpush2.msra.mxu0 0.0
    %374 = vmatprep.subr.mxu0 0.0
    %375 = vmatpush2.msra.mxu0 0.0
    %376 = vmatprep.subr.mxu0 0.0
    %377 = vmatpush2.msra.mxu0 0.0
    %378 = vmatprep.subr.mxu0 0.0
    %379 = vmatpush2.msra.mxu0 0.0
    %380 = vmatprep.subr.mxu0 0.0
    %381 = vmatpush2.msra.mxu0 0.0
    %382 = vmatprep.subr.mxu0 0.0
    %383 = vmatpush2.msra.mxu0 0.0
    %384 = vmatprep.subr.mxu0 0.0
    %385 = vmatpush2.msra.mxu0 0.0
    %386 = vmatprep.subr.mxu0 0.0
    %387 = vmatpush2.msra.mxu0 0.0
    %388 = vmatprep.subr.mxu0 0.0
    %389 = vmatpush2.msra.mxu0 0.0
    %390 = vmatprep.subr.mxu0 0.0
    %391 = vmatpush2.msra.mxu0 0.0
    %392 = vmatprep.subr.mxu0 0.0
    %393 = vmatpush2.msra.mxu0 0.0
    %394 = vmatprep.subr.mxu0 0.0
    %395 = vmatpush2.msra.mxu0 0.0
    %396 = vmatprep.subr.mxu0 0.0
    %397 = vmatpush2.msra.mxu0 0.0
    %398 = vmatprep.subr.mxu0 0.0
    %399 = vmatpush2.msra.mxu0 0.0
    %400 = vmatprep.subr.mxu0 0.0
    %401 = vmatpush2.msra.mxu0 0.0
    %402 = vmatprep.mubr.f32.mxu0 0.0
    %403 = vmatmul.mubr.f32.gmra.mxu0 %v259
    %v404 = vpop.f32.mrf.mxu0
    %v405 = vadd.f32 0.0, %v404
    %v406 = vpop.f32.mrf.mxu0
    %407 = vdwg.mxu0
    %v408 = vmul.f32 %v405, 0.015625
    %v409 = vmul.f32 %v334, %v334
    %v410 = vsub.f32 %v408, %v409
    %v411 = vadd.f32 %v410, 1e-05
    %v412 = vrsqrt.pop %v411
    %vm413 = vcmask 23552
    %v415 = vsel %vm413, %v82, 0
    %v418 = vsel %vm413, %v83, 0
    %vm420 = vcmask 1042432
    %v422 = vsel %vm420, %v334, 0
    %424 = vmatprep.subr.mxu0 0.0
    %425 = vmatpush1.msra.mxu0 0.0
    %426 = vmatprep.subr.mxu0 0.0
    %427 = vmatpush1.msra.mxu0 0.0
    %428 = vmatprep.subr.mxu0 0.0
    %429 = vmatpush1.msra.mxu0 0.0
    %430 = vmatprep.subr.mxu0 0.0
    %431 = vmatpush1.msra.mxu0 0.0
    %432 = vmatprep.subr.mxu0 0.0
    %433 = vmatpush1.msra.mxu0 0.0
    %434 = vmatprep.subr.mxu0 0.0
    %435 = vmatpush1.msra.mxu0 0.0
    %436 = vmatprep.subr.mxu0 0.0
    %437 = vmatpush1.msra.mxu0 0.0
    %438 = vmatprep.subr.mxu0 0.0
    %439 = vmatpush1.msra.mxu0 0.0
    %440 = vmatprep.subr.mxu0 0.0
    %441 = vmatpush1.msra.mxu0 0.0
    %442 = vmatprep.subr.mxu0 0.0
    %443 = vmatpush1.msra.mxu0 0.0
    %444 = vmatprep.subr.mxu0 0.0
    %445 = vmatpush1.msra.mxu0 0.0
    %446 = vmatprep.subr.mxu0 0.0
    %447 = vmatpush1.msra.mxu0 0.0
    %448 = vmatprep.subr.mxu0 0.0
    %449 = vmatpush1.msra.mxu0 0.0
    %450 = vmatprep.subr.mxu0 0.0
    %451 = vmatpush1.msra.mxu0 0.0
    %452 = vmatprep.subr.mxu0 0.0
    %453 = vmatpush1.msra.mxu0 0.0
    %454 = vmatprep.subr.mxu0 0.0
    %455 = vmatpush1.msra.mxu0 %v422
    %456 = vmatprep.subr.mxu0 0.0
    %457 = vmatpush2.msra.mxu0 0.0
    %458 = vmatprep.subr.mxu0 0.0
    %459 = vmatpush2.msra.mxu0 0.0
    %460 = vmatprep.subr.mxu0 0.0
    %461 = vmatpush2.msra.mxu0 0.0
    %462 = vmatprep.subr.mxu0 0.0
    %463 = vmatpush2.msra.mxu0 0.0
    %464 = vmatprep.subr.mxu0 0.0
    %465 = vmatpush2.msra.mxu0 0.0
    %466 = vmatprep.subr.mxu0 0.0
    %467 = vmatpush2.msra.mxu0 0.0
    %468 = vmatprep.subr.mxu0 0.0
    %469 = vmatpush2.msra.mxu0 0.0
    %470 = vmatprep.subr.mxu0 0.0
    %471 = vmatpush2.msra.mxu0 0.0
    %472 = vmatprep.subr.mxu0 0.0
    %473 = vmatpush2.msra.mxu0 0.0
    %474 = vmatprep.subr.mxu0 0.0
    %475 = vmatpush2.msra.mxu0 0.0
    %476 = vmatprep.subr.mxu0 0.0
    %477 = vmatpush2.msra.mxu0 0.0
    %478 = vmatprep.subr.mxu0 0.0
    %479 = vmatpush2.msra.mxu0 0.0
    %480 = vmatprep.subr.mxu0 0.0
    %481 = vmatpush2.msra.mxu0 0.0
    %482 = vmatprep.subr.mxu0 0.0
    %483 = vmatpush2.msra.mxu0 0.0
    %484 = vmatprep.subr.mxu0 0.0
    %485 = vmatpush2.msra.mxu0 0.0
    %486 = vmatprep.subr.mxu0 0.0
    %487 = vmatpush2.msra.mxu0 0.0
    %488 = vmatprep.mubr.f32.mxu0 0.0
    %489 = vmatmul.mubr.f32.gmra.mxu0 %v415
    %v490 = vpop.f32.mrf.mxu0
    %v491 = vadd.f32 0.0, %v490
    %v492 = vpop.f32.mrf.mxu0
    %493 = vmatprep.mubr.f32.mxu0 0.0
    %494 = vmatmul.mubr.f32.gmra.mxu0 %v418
    %v495 = vpop.f32.mrf.mxu0
    %v496 = vadd.f32 0.0, %v495
    %v497 = vpop.f32.mrf.mxu0
    %498 = vdwg.mxu0
    %vm499 = vcmask 15360
    %v501 = vsel %vm499, %v491, 0
    %v504 = vsel %vm499, %v496, 0
    %vm506 = vcmask 1041408
    %v508 = vsel %vm506, %v80, 0
    %510 = vmatprep.subr.mxu0 0.0
    %511 = vmatpush1.msra.mxu0 0.0
    %512 = vmatprep.subr.mxu0 0.0
    %513 = vmatpush1.msra.mxu0 0.0
    %514 = vmatprep.subr.mxu0 0.0
    %515 = vmatpush1.msra.mxu0 0.0
    %516 = vmatprep.subr.mxu0 0.0
    %517 = vmatpush1.msra.mxu0 0.0
    %518 = vmatprep.subr.mxu0 0.0
    %519 = vmatpush1.msra.mxu0 0.0
    %520 = vmatprep.subr.mxu0 0.0
    %521 = vmatpush1.msra.mxu0 0.0
    %522 = vmatprep.subr.mxu0 0.0
    %523 = vmatpush1.msra.mxu0 0.0
    %524 = vmatprep.subr.mxu0 0.0
    %525 = vmatpush1.msra.mxu0 0.0
    %526 = vmatprep.subr.mxu0 0.0
    %527 = vmatpush1.msra.mxu0 0.0
    %528 = vmatprep.subr.mxu0 0.0
    %529 = vmatpush1.msra.mxu0 0.0
    %530 = vmatprep.subr.mxu0 0.0
    %531 = vmatpush1.msra.mxu0 0.0
    %532 = vmatprep.subr.mxu0 0.0
    %533 = vmatpush1.msra.mxu0 0.0
    %534 = vmatprep.subr.mxu0 0.0
    %535 = vmatpush1.msra.mxu0 0.0
    %536 = vmatprep.subr.mxu0 0.0
    %537 = vmatpush1.msra.mxu0 0.0
    %538 = vmatprep.subr.mxu0 0.0
    %539 = vmatpush1.msra.mxu0 0.0
    %540 = vmatprep.subr.mxu0 0.0
    %541 = vmatpush1.msra.mxu0 %v508
    %542 = vmatprep.subr.mxu0 0.0
    %543 = vmatpush2.msra.mxu0 0.0
    %544 = vmatprep.subr.mxu0 0.0
    %545 = vmatpush2.msra.mxu0 0.0
    %546 = vmatprep.subr.mxu0 0.0
    %547 = vmatpush2.msra.mxu0 0.0
    %548 = vmatprep.subr.mxu0 0.0
    %549 = vmatpush2.msra.mxu0 0.0
    %550 = vmatprep.subr.mxu0 0.0
    %551 = vmatpush2.msra.mxu0 0.0
    %552 = vmatprep.subr.mxu0 0.0
    %553 = vmatpush2.msra.mxu0 0.0
    %554 = vmatprep.subr.mxu0 0.0
    %555 = vmatpush2.msra.mxu0 0.0
    %556 = vmatprep.subr.mxu0 0.0
    %557 = vmatpush2.msra.mxu0 0.0
    %558 = vmatprep.subr.mxu0 0.0
    %559 = vmatpush2.msra.mxu0 0.0
    %560 = vmatprep.subr.mxu0 0.0
    %561 = vmatpush2.msra.mxu0 0.0
    %562 = vmatprep.subr.mxu0 0.0
    %563 = vmatpush2.msra.mxu0 0.0
    %564 = vmatprep.subr.mxu0 0.0
    %565 = vmatpush2.msra.mxu0 0.0
    %566 = vmatprep.subr.mxu0 0.0
    %567 = vmatpush2.msra.mxu0 0.0
    %568 = vmatprep.subr.mxu0 0.0
    %569 = vmatpush2.msra.mxu0 0.0
    %570 = vmatprep.subr.mxu0 0.0
    %571 = vmatpush2.msra.mxu0 0.0
    %572 = vmatprep.subr.mxu0 0.0
    %573 = vmatpush2.msra.mxu0 0.0
    %574 = vmatprep.mubr.f32.mxu0 0.0
    %575 = vmatmul.mubr.f32.gmra.mxu0 %v501
    %v576 = vpop.f32.mrf.mxu0
    %v577 = vadd.f32 0.0, %v576
    %v578 = vpop.f32.mrf.mxu0
    %579 = vmatprep.mubr.f32.mxu0 0.0
    %580 = vmatmul.mubr.f32.gmra.mxu0 %v504
    %v581 = vpop.f32.mrf.mxu0
    %v582 = vadd.f32 0.0, %v581
    %v583 = vpop.f32.mrf.mxu0
    %584 = vdwg.mxu0
    %v586 = vsel %vm420, %v412, 0
    %588 = vmatprep.subr.mxu0 0.0
    %589 = vmatpush1.msra.mxu0 0.0
    %590 = vmatprep.subr.mxu0 0.0
    %591 = vmatpush1.msra.mxu0 0.0
    %592 = vmatprep.subr.mxu0 0.0
    %593 = vmatpush1.msra.mxu0 0.0
    %594 = vmatprep.subr.mxu0 0.0
    %595 = vmatpush1.msra.mxu0 0.0
    %596 = vmatprep.subr.mxu0 0.0
    %597 = vmatpush1.msra.mxu0 0.0
    %598 = vmatprep.subr.mxu0 0.0
    %599 = vmatpush1.msra.mxu0 0.0
    %600 = vmatprep.subr.mxu0 0.0
    %601 = vmatpush1.msra.mxu0 0.0
    %602 = vmatprep.subr.mxu0 0.0
    %603 = vmatpush1.msra.mxu0 0.0
    %604 = vmatprep.subr.mxu0 0.0
    %605 = vmatpush1.msra.mxu0 0.0
    %606 = vmatprep.subr.mxu0 0.0
    %607 = vmatpush1.msra.mxu0 0.0
    %608 = vmatprep.subr.mxu0 0.0
    %609 = vmatpush1.msra.mxu0 0.0
    %610 = vmatprep.subr.mxu0 0.0
    %611 = vmatpush1.msra.mxu0 0.0
    %612 = vmatprep.subr.mxu0 0.0
    %613 = vmatpush1.msra.mxu0 0.0
    %614 = vmatprep.subr.mxu0 0.0
    %615 = vmatpush1.msra.mxu0 0.0
    %616 = vmatprep.subr.mxu0 0.0
    %617 = vmatpush1.msra.mxu0 0.0
    %618 = vmatprep.subr.mxu0 0.0
    %619 = vmatpush1.msra.mxu0 %v586
    %620 = vmatprep.subr.mxu0 0.0
    %621 = vmatpush2.msra.mxu0 0.0
    %622 = vmatprep.subr.mxu0 0.0
    %623 = vmatpush2.msra.mxu0 0.0
    %624 = vmatprep.subr.mxu0 0.0
    %625 = vmatpush2.msra.mxu0 0.0
    %626 = vmatprep.subr.mxu0 0.0
    %627 = vmatpush2.msra.mxu0 0.0
    %628 = vmatprep.subr.mxu0 0.0
    %629 = vmatpush2.msra.mxu0 0.0
    %630 = vmatprep.subr.mxu0 0.0
    %631 = vmatpush2.msra.mxu0 0.0
    %632 = vmatprep.subr.mxu0 0.0
    %633 = vmatpush2.msra.mxu0 0.0
    %634 = vmatprep.subr.mxu0 0.0
    %635 = vmatpush2.msra.mxu0 0.0
    %636 = vmatprep.subr.mxu0 0.0
    %637 = vmatpush2.msra.mxu0 0.0
    %638 = vmatprep.subr.mxu0 0.0
    %639 = vmatpush2.msra.mxu0 0.0
    %640 = vmatprep.subr.mxu0 0.0
    %641 = vmatpush2.msra.mxu0 0.0
    %642 = vmatprep.subr.mxu0 0.0
    %643 = vmatpush2.msra.mxu0 0.0
    %644 = vmatprep.subr.mxu0 0.0
    %645 = vmatpush2.msra.mxu0 0.0
    %646 = vmatprep.subr.mxu0 0.0
    %647 = vmatpush2.msra.mxu0 0.0
    %648 = vmatprep.subr.mxu0 0.0
    %649 = vmatpush2.msra.mxu0 0.0
    %650 = vmatprep.subr.mxu0 0.0
    %651 = vmatpush2.msra.mxu0 0.0
    %652 = vmatprep.mubr.f32.mxu0 0.0
    %653 = vmatmul.mubr.f32.gmra.mxu0 %v415
    %v654 = vpop.f32.mrf.mxu0
    %v655 = vadd.f32 0.0, %v654
    %v656 = vpop.f32.mrf.mxu0
    %657 = vmatprep.mubr.f32.mxu0 0.0
    %658 = vmatmul.mubr.f32.gmra.mxu0 %v418
    %v659 = vpop.f32.mrf.mxu0
    %v660 = vadd.f32 0.0, %v659
    %v661 = vpop.f32.mrf.mxu0
    %662 = vdwg.mxu0
    %v664 = vsel %vm499, %v655, 0
    %v667 = vsel %vm499, %v660, 0
    %669 = vmatprep.subr.mxu0 0.0
    %670 = vmatpush1.msra.mxu0 0.0
    %671 = vmatprep.subr.mxu0 0.0
    %672 = vmatpush1.msra.mxu0 0.0
    %673 = vmatprep.subr.mxu0 0.0
    %674 = vmatpush1.msra.mxu0 0.0
    %675 = vmatprep.subr.mxu0 0.0
    %676 = vmatpush1.msra.mxu0 0.0
    %677 = vmatprep.subr.mxu0 0.0
    %678 = vmatpush1.msra.mxu0 0.0
    %679 = vmatprep.subr.mxu0 0.0
    %680 = vmatpush1.msra.mxu0 0.0
    %681 = vmatprep.subr.mxu0 0.0
    %682 = vmatpush1.msra.mxu0 0.0
    %683 = vmatprep.subr.mxu0 0.0
    %684 = vmatpush1.msra.mxu0 0.0
    %685 = vmatprep.subr.mxu0 0.0
    %686 = vmatpush1.msra.mxu0 0.0
    %687 = vmatprep.subr.mxu0 0.0
    %688 = vmatpush1.msra.mxu0 0.0
    %689 = vmatprep.subr.mxu0 0.0
    %690 = vmatpush1.msra.mxu0 0.0
    %691 = vmatprep.subr.mxu0 0.0
    %692 = vmatpush1.msra.mxu0 0.0
    %693 = vmatprep.subr.mxu0 0.0
    %694 = vmatpush1.msra.mxu0 0.0
    %695 = vmatprep.subr.mxu0 0.0
    %696 = vmatpush1.msra.mxu0 0.0
    %697 = vmatprep.subr.mxu0 0.0
    %698 = vmatpush1.msra.mxu0 0.0
    %699 = vmatprep.subr.mxu0 0.0
    %700 = vmatpush1.msra.mxu0 %v508
    %701 = vmatprep.subr.mxu0 0.0
    %702 = vmatpush2.msra.mxu0 0.0
    %703 = vmatprep.subr.mxu0 0.0
    %704 = vmatpush2.msra.mxu0 0.0
    %705 = vmatprep.subr.mxu0 0.0
    %706 = vmatpush2.msra.mxu0 0.0
    %707 = vmatprep.subr.mxu0 0.0
    %708 = vmatpush2.msra.mxu0 0.0
    %709 = vmatprep.subr.mxu0 0.0
    %710 = vmatpush2.msra.mxu0 0.0
    %711 = vmatprep.subr.mxu0 0.0
    %712 = vmatpush2.msra.mxu0 0.0
    %713 = vmatprep.subr.mxu0 0.0
    %714 = vmatpush2.msra.mxu0 0.0
    %715 = vmatprep.subr.mxu0 0.0
    %716 = vmatpush2.msra.mxu0 0.0
    %717 = vmatprep.subr.mxu0 0.0
    %718 = vmatpush2.msra.mxu0 0.0
    %719 = vmatprep.subr.mxu0 0.0
    %720 = vmatpush2.msra.mxu0 0.0
    %721 = vmatprep.subr.mxu0 0.0
    %722 = vmatpush2.msra.mxu0 0.0
    %723 = vmatprep.subr.mxu0 0.0
    %724 = vmatpush2.msra.mxu0 0.0
    %725 = vmatprep.subr.mxu0 0.0
    %726 = vmatpush2.msra.mxu0 0.0
    %727 = vmatprep.subr.mxu0 0.0
    %728 = vmatpush2.msra.mxu0 0.0
    %729 = vmatprep.subr.mxu0 0.0
    %730 = vmatpush2.msra.mxu0 0.0
    %731 = vmatprep.subr.mxu0 0.0
    %732 = vmatpush2.msra.mxu0 0.0
    %733 = vmatprep.mubr.f32.mxu0 0.0
    %734 = vmatmul.mubr.f32.gmra.mxu0 %v664
    %v735 = vpop.f32.mrf.mxu0
    %v736 = vadd.f32 0.0, %v735
    %v737 = vpop.f32.mrf.mxu0
    %738 = vmatprep.mubr.f32.mxu0 0.0
    %739 = vmatmul.mubr.f32.gmra.mxu0 %v667
    %v740 = vpop.f32.mrf.mxu0
    %v741 = vadd.f32 0.0, %v740
    %v742 = vpop.f32.mrf.mxu0
    %743 = vdwg.mxu0
    %v744 = vsub.f32 %v72, %v577
    %v745 = vsub.f32 %v73, %v582
    %v746 = vmul.f32 %v744, %v736
    %v747 = vmul.f32 %v745, %v741
    %749 = vset.pattern.permute.xlu0 0
    %750 = vperm.xlu0 %749, %v84
    %v751 = vpop.permute.xlu0 %750
    %754 = vset.pattern.permute.xlu0 0
    %755 = vperm.xlu0 %754, %v85
    %v756 = vpop.permute.xlu0 %755
    %v758 = vmul.f32 %v746, %v751
    %v759 = vmul.f32 %v747, %v756
    %761 = vset.pattern.permute.xlu0 0
    %762 = vperm.xlu0 %761, %v86
    %v763 = vpop.permute.xlu0 %762
    %766 = vset.pattern.permute.xlu0 0
    %767 = vperm.xlu0 %766, %v87
    %v768 = vpop.permute.xlu0 %767
    %v770 = vadd.f32 %v758, %v763
    %v771 = vadd.f32 %v759, %v768
    %v772 = vxor.u32 %v770, 2147483648
    %v773 = vxor.u32 %v771, 2147483648
    %v774 = vmul.f32 %v772, 1.442695
    %v775 = vpow.pop %v774
    %v776 = vmul.f32 %v773, 1.442695
    %v777 = vpow.pop %v776
    %v778 = vadd.f32 %v775, 1.0
    %v779 = vadd.f32 %v777, 1.0
    %v780 = vrcp.pop %v778
    %v781 = vmul.f32 1.0, %v780
    %v782 = vrcp.pop %v779
    %v783 = vmul.f32 1.0, %v782
    %v784 = vmul.f32 %v770, %v781
    %v785 = vmul.f32 %v771, %v783
    %v787 = vlaneseq
    %v788 = vshrl.u32 %v787, 7
    %v789 = vsub.s32 0, %v788
    %v790 = vrot.slane %v74, %v789
    %v792 = vmul.f32 %v784, %v790
    %v793 = vmul.f32 %v785, %v790
    %796 = vrot.lane.b32.xlu0 %v792, 1
    %v797 = vpop.permute.xlu0 %796
    %798 = vrot.lane.b32.xlu0 %v793, 1
    %v799 = vpop.permute.xlu0 %798
    %vm802 = vcmask 7168
    %v803 = vsel %vm802, 0.0, %v797
    %v804 = vsel %vm802, 0.0, %v799
    %vm805 = vcmask 302080
    %v806 = vsel %vm805, %v803, 0.0
    %v807 = vsel %vm805, %v804, 0.0
    %v810 = vrot.slane %v806, 4
    %v811 = vrot.slane %v807, 4
    %v812 = vsel %vm95, %v810, %v811
    %813 = vrot.lane.b32.xlu0 %v810, 127
    %v814 = vpop.permute.xlu0 %813
    %815 = vrot.lane.b32.xlu0 %v812, 127
    %v816 = vpop.permute.xlu0 %815
    %819 = vrot.lane.b32.xlu0 %v806, 126
    %v820 = vpop.permute.xlu0 %819
    %821 = vrot.lane.b32.xlu0 %v807, 126
    %v822 = vpop.permute.xlu0 %821
    %v824 = vsel %vm95, %v807, %v814
    %v825 = vld [vmem:[%s12] sm:$0xff]
    %v826 = vld [vmem:[%s13] sm:$0xff]
    %828 = vset.pattern.permute.xlu0 0
    %829 = vperm.xlu0 %828, %v826
    %v830 = vpop.permute.xlu0 %829
    %v833 = vsel %vm88, %v825, 0
    %v835 = vsel %vm95, %v822, 0
    %837 = vmatprep.subr.mxu0 0.0
    %838 = vmatpush1.msra.mxu0 0.0
    %839 = vmatprep.subr.mxu0 0.0
    %840 = vmatpush1.msra.mxu0 0.0
    %841 = vmatprep.subr.mxu0 0.0
    %842 = vmatpush1.msra.mxu0 0.0
    %843 = vmatprep.subr.mxu0 0.0
    %844 = vmatpush1.msra.mxu0 0.0
    %845 = vmatprep.subr.mxu0 0.0
    %846 = vmatpush1.msra.mxu0 0.0
    %847 = vmatprep.subr.mxu0 0.0
    %848 = vmatpush1.msra.mxu0 0.0
    %849 = vmatprep.subr.mxu0 0.0
    %850 = vmatpush1.msra.mxu0 0.0
    %851 = vmatprep.subr.mxu0 0.0
    %852 = vmatpush1.msra.mxu0 0.0
    %853 = vmatprep.subr.mxu0 0.0
    %854 = vmatpush1.msra.mxu0 0.0
    %855 = vmatprep.subr.mxu0 0.0
    %856 = vmatpush1.msra.mxu0 0.0
    %857 = vmatprep.subr.mxu0 0.0
    %858 = vmatpush1.msra.mxu0 0.0
    %859 = vmatprep.subr.mxu0 0.0
    %860 = vmatpush1.msra.mxu0 %v835
    %861 = vmatprep.subr.mxu0 0.0
    %862 = vmatpush1.msra.mxu0 %v820
    %863 = vmatprep.subr.mxu0 0.0
    %864 = vmatpush1.msra.mxu0 %v816
    %865 = vmatprep.subr.mxu0 0.0
    %866 = vmatpush1.msra.mxu0 %v824
    %867 = vmatprep.subr.mxu0 0.0
    %868 = vmatpush1.msra.mxu0 %v806
    %869 = vmatprep.subr.mxu0 0.0
    %870 = vmatpush2.msra.mxu0 0.0
    %871 = vmatprep.subr.mxu0 0.0
    %872 = vmatpush2.msra.mxu0 0.0
    %873 = vmatprep.subr.mxu0 0.0
    %874 = vmatpush2.msra.mxu0 0.0
    %875 = vmatprep.subr.mxu0 0.0
    %876 = vmatpush2.msra.mxu0 0.0
    %877 = vmatprep.subr.mxu0 0.0
    %878 = vmatpush2.msra.mxu0 0.0
    %879 = vmatprep.subr.mxu0 0.0
    %880 = vmatpush2.msra.mxu0 0.0
    %881 = vmatprep.subr.mxu0 0.0
    %882 = vmatpush2.msra.mxu0 0.0
    %883 = vmatprep.subr.mxu0 0.0
    %884 = vmatpush2.msra.mxu0 0.0
    %885 = vmatprep.subr.mxu0 0.0
    %886 = vmatpush2.msra.mxu0 0.0
    %887 = vmatprep.subr.mxu0 0.0
    %888 = vmatpush2.msra.mxu0 0.0
    %889 = vmatprep.subr.mxu0 0.0
    %890 = vmatpush2.msra.mxu0 0.0
    %891 = vmatprep.subr.mxu0 0.0
    %892 = vmatpush2.msra.mxu0 0.0
    %893 = vmatprep.subr.mxu0 0.0
    %894 = vmatpush2.msra.mxu0 0.0
    %895 = vmatprep.subr.mxu0 0.0
    %896 = vmatpush2.msra.mxu0 0.0
    %897 = vmatprep.subr.mxu0 0.0
    %898 = vmatpush2.msra.mxu0 0.0
    %899 = vmatprep.subr.mxu0 0.0
    %900 = vmatpush2.msra.mxu0 0.0
    %901 = vmatprep.mubr.f32.mxu0 0.0
    %902 = vmatmul.mubr.f32.gmra.mxu0 %v833
    %v903 = vpop.f32.mrf.mxu0
    %v904 = vadd.f32 %v830, %v903
    %v905 = vpop.f32.mrf.mxu0
    %906 = vdwg.mxu0
    %v907 = vld [vmem:[%s1] sm:$0xff]
    %v909 = vsel %vm499, %v907, 0
    %911 = vmatprep.subr.mxu0 0.0
    %912 = vmatpush1.msra.mxu0 0.0
    %913 = vmatprep.subr.mxu0 0.0
    %914 = vmatpush1.msra.mxu0 0.0
    %915 = vmatprep.subr.mxu0 0.0
    %916 = vmatpush1.msra.mxu0 0.0
    %917 = vmatprep.subr.mxu0 0.0
    %918 = vmatpush1.msra.mxu0 0.0
    %919 = vmatprep.subr.mxu0 0.0
    %920 = vmatpush1.msra.mxu0 0.0
    %921 = vmatprep.subr.mxu0 0.0
    %922 = vmatpush1.msra.mxu0 0.0
    %923 = vmatprep.subr.mxu0 0.0
    %924 = vmatpush1.msra.mxu0 0.0
    %925 = vmatprep.subr.mxu0 0.0
    %926 = vmatpush1.msra.mxu0 0.0
    %927 = vmatprep.subr.mxu0 0.0
    %928 = vmatpush1.msra.mxu0 0.0
    %929 = vmatprep.subr.mxu0 0.0
    %930 = vmatpush1.msra.mxu0 0.0
    %931 = vmatprep.subr.mxu0 0.0
    %932 = vmatpush1.msra.mxu0 0.0
    %933 = vmatprep.subr.mxu0 0.0
    %934 = vmatpush1.msra.mxu0 0.0
    %935 = vmatprep.subr.mxu0 0.0
    %936 = vmatpush1.msra.mxu0 0.0
    %937 = vmatprep.subr.mxu0 0.0
    %938 = vmatpush1.msra.mxu0 0.0
    %939 = vmatprep.subr.mxu0 0.0
    %940 = vmatpush1.msra.mxu0 0.0
    %941 = vmatprep.subr.mxu0 0.0
    %942 = vmatpush1.msra.mxu0 %v508
    %943 = vmatprep.subr.mxu0 0.0
    %944 = vmatpush2.msra.mxu0 0.0
    %945 = vmatprep.subr.mxu0 0.0
    %946 = vmatpush2.msra.mxu0 0.0
    %947 = vmatprep.subr.mxu0 0.0
    %948 = vmatpush2.msra.mxu0 0.0
    %949 = vmatprep.subr.mxu0 0.0
    %950 = vmatpush2.msra.mxu0 0.0
    %951 = vmatprep.subr.mxu0 0.0
    %952 = vmatpush2.msra.mxu0 0.0
    %953 = vmatprep.subr.mxu0 0.0
    %954 = vmatpush2.msra.mxu0 0.0
    %955 = vmatprep.subr.mxu0 0.0
    %956 = vmatpush2.msra.mxu0 0.0
    %957 = vmatprep.subr.mxu0 0.0
    %958 = vmatpush2.msra.mxu0 0.0
    %959 = vmatprep.subr.mxu0 0.0
    %960 = vmatpush2.msra.mxu0 0.0
    %961 = vmatprep.subr.mxu0 0.0
    %962 = vmatpush2.msra.mxu0 0.0
    %963 = vmatprep.subr.mxu0 0.0
    %964 = vmatpush2.msra.mxu0 0.0
    %965 = vmatprep.subr.mxu0 0.0
    %966 = vmatpush2.msra.mxu0 0.0
    %967 = vmatprep.subr.mxu0 0.0
    %968 = vmatpush2.msra.mxu0 0.0
    %969 = vmatprep.subr.mxu0 0.0
    %970 = vmatpush2.msra.mxu0 0.0
    %971 = vmatprep.subr.mxu0 0.0
    %972 = vmatpush2.msra.mxu0 0.0
    %973 = vmatprep.subr.mxu0 0.0
    %974 = vmatpush2.msra.mxu0 0.0
    %975 = vmatprep.mubr.f32.mxu0 0.0
    %976 = vmatmul.mubr.f32.gmra.mxu0 %v909
    %v977 = vpop.f32.mrf.mxu0
    %v978 = vadd.f32 0.0, %v977
    %v979 = vpop.f32.mrf.mxu0
    %980 = vdwg.mxu0
    %v981 = vld [vmem:[%s2] sm:$0xff]
    %v983 = vsel %vm499, %v981, 0
    %985 = vmatprep.subr.mxu0 0.0
    %986 = vmatpush1.msra.mxu0 0.0
    %987 = vmatprep.subr.mxu0 0.0
    %988 = vmatpush1.msra.mxu0 0.0
    %989 = vmatprep.subr.mxu0 0.0
    %990 = vmatpush1.msra.mxu0 0.0
    %991 = vmatprep.subr.mxu0 0.0
    %992 = vmatpush1.msra.mxu0 0.0
    %993 = vmatprep.subr.mxu0 0.0
    %994 = vmatpush1.msra.mxu0 0.0
    %995 = vmatprep.subr.mxu0 0.0
    %996 = vmatpush1.msra.mxu0 0.0
    %997 = vmatprep.subr.mxu0 0.0
    %998 = vmatpush1.msra.mxu0 0.0
    %999 = vmatprep.subr.mxu0 0.0
    %1000 = vmatpush1.msra.mxu0 0.0
    %1001 = vmatprep.subr.mxu0 0.0
    %1002 = vmatpush1.msra.mxu0 0.0
    %1003 = vmatprep.subr.mxu0 0.0
    %1004 = vmatpush1.msra.mxu0 0.0
    %1005 = vmatprep.subr.mxu0 0.0
    %1006 = vmatpush1.msra.mxu0 0.0
    %1007 = vmatprep.subr.mxu0 0.0
    %1008 = vmatpush1.msra.mxu0 0.0
    %1009 = vmatprep.subr.mxu0 0.0
    %1010 = vmatpush1.msra.mxu0 0.0
    %1011 = vmatprep.subr.mxu0 0.0
    %1012 = vmatpush1.msra.mxu0 0.0
    %1013 = vmatprep.subr.mxu0 0.0
    %1014 = vmatpush1.msra.mxu0 0.0
    %1015 = vmatprep.subr.mxu0 0.0
    %1016 = vmatpush1.msra.mxu0 %v508
    %1017 = vmatprep.subr.mxu0 0.0
    %1018 = vmatpush2.msra.mxu0 0.0
    %1019 = vmatprep.subr.mxu0 0.0
    %1020 = vmatpush2.msra.mxu0 0.0
    %1021 = vmatprep.subr.mxu0 0.0
    %1022 = vmatpush2.msra.mxu0 0.0
    %1023 = vmatprep.subr.mxu0 0.0
    %1024 = vmatpush2.msra.mxu0 0.0
    %1025 = vmatprep.subr.mxu0 0.0
    %1026 = vmatpush2.msra.mxu0 0.0
    %1027 = vmatprep.subr.mxu0 0.0
    %1028 = vmatpush2.msra.mxu0 0.0
    %1029 = vmatprep.subr.mxu0 0.0
    %1030 = vmatpush2.msra.mxu0 0.0
    %1031 = vmatprep.subr.mxu0 0.0
    %1032 = vmatpush2.msra.mxu0 0.0
    %1033 = vmatprep.subr.mxu0 0.0
    %1034 = vmatpush2.msra.mxu0 0.0
    %1035 = vmatprep.subr.mxu0 0.0
    %1036 = vmatpush2.msra.mxu0 0.0
    %1037 = vmatprep.subr.mxu0 0.0
    %1038 = vmatpush2.msra.mxu0 0.0
    %1039 = vmatprep.subr.mxu0 0.0
    %1040 = vmatpush2.msra.mxu0 0.0
    %1041 = vmatprep.subr.mxu0 0.0
    %1042 = vmatpush2.msra.mxu0 0.0
    %1043 = vmatprep.subr.mxu0 0.0
    %1044 = vmatpush2.msra.mxu0 0.0
    %1045 = vmatprep.subr.mxu0 0.0
    %1046 = vmatpush2.msra.mxu0 0.0
    %1047 = vmatprep.subr.mxu0 0.0
    %1048 = vmatpush2.msra.mxu0 0.0
    %1049 = vmatprep.mubr.f32.mxu0 0.0
    %1050 = vmatmul.mubr.f32.gmra.mxu0 %v983
    %v1051 = vpop.f32.mrf.mxu0
    %v1052 = vadd.f32 0.0, %v1051
    %v1053 = vpop.f32.mrf.mxu0
    %1054 = vdwg.mxu0
    %v1055 = vmul.f32 %v904, %v978
    %v1056 = vadd.f32 %v1055, %v1052
    %v1057 = vmul.f32 %v1056, %v790
    %v1058 = vld [vmem:[%s8] sm:$0x3]
    %v1059 = vld [vmem:[%s9] sm:$0xff]
    %v1060 = vld [vmem:[%s14] sm:$0xff]
    %v1061 = vld [vmem:[%s15] sm:$0xff]
    %v1063 = vsel %vm88, %v1057, 0
    %1065 = vmatprep.subr.mxu0 0.0
    %1066 = vmatpush1.msra.mxu0 0.0
    %1067 = vmatprep.subr.mxu0 0.0
    %1068 = vmatpush1.msra.mxu0 0.0
    %1069 = vmatprep.subr.mxu0 0.0
    %1070 = vmatpush1.msra.mxu0 0.0
    %1071 = vmatprep.subr.mxu0 0.0
    %1072 = vmatpush1.msra.mxu0 0.0
    %1073 = vmatprep.subr.mxu0 0.0
    %1074 = vmatpush1.msra.mxu0 0.0
    %1075 = vmatprep.subr.mxu0 0.0
    %1076 = vmatpush1.msra.mxu0 0.0
    %1077 = vmatprep.subr.mxu0 0.0
    %1078 = vmatpush1.msra.mxu0 0.0
    %1079 = vmatprep.subr.mxu0 0.0
    %1080 = vmatpush1.msra.mxu0 0.0
    %1081 = vmatprep.subr.mxu0 0.0
    %1082 = vmatpush1.msra.mxu0 0.0
    %1083 = vmatprep.subr.mxu0 0.0
    %1084 = vmatpush1.msra.mxu0 0.0
    %1085 = vmatprep.subr.mxu0 0.0
    %1086 = vmatpush1.msra.mxu0 0.0
    %1087 = vmatprep.subr.mxu0 0.0
    %1088 = vmatpush1.msra.mxu0 %v97
    %1089 = vmatprep.subr.mxu0 0.0
    %1090 = vmatpush1.msra.mxu0 %v78
    %1091 = vmatprep.subr.mxu0 0.0
    %1092 = vmatpush1.msra.mxu0 %v77
    %1093 = vmatprep.subr.mxu0 0.0
    %1094 = vmatpush1.msra.mxu0 %v76
    %1095 = vmatprep.subr.mxu0 0.0
    %1096 = vmatpush1.msra.mxu0 %v75
    %1097 = vmatprep.subr.mxu0 0.0
    %1098 = vmatpush2.msra.mxu0 0.0
    %1099 = vmatprep.subr.mxu0 0.0
    %1100 = vmatpush2.msra.mxu0 0.0
    %1101 = vmatprep.subr.mxu0 0.0
    %1102 = vmatpush2.msra.mxu0 0.0
    %1103 = vmatprep.subr.mxu0 0.0
    %1104 = vmatpush2.msra.mxu0 0.0
    %1105 = vmatprep.subr.mxu0 0.0
    %1106 = vmatpush2.msra.mxu0 0.0
    %1107 = vmatprep.subr.mxu0 0.0
    %1108 = vmatpush2.msra.mxu0 0.0
    %1109 = vmatprep.subr.mxu0 0.0
    %1110 = vmatpush2.msra.mxu0 0.0
    %1111 = vmatprep.subr.mxu0 0.0
    %1112 = vmatpush2.msra.mxu0 0.0
    %1113 = vmatprep.subr.mxu0 0.0
    %1114 = vmatpush2.msra.mxu0 0.0
    %1115 = vmatprep.subr.mxu0 0.0
    %1116 = vmatpush2.msra.mxu0 0.0
    %1117 = vmatprep.subr.mxu0 0.0
    %1118 = vmatpush2.msra.mxu0 0.0
    %1119 = vmatprep.subr.mxu0 0.0
    %1120 = vmatpush2.msra.mxu0 0.0
    %1121 = vmatprep.subr.mxu0 0.0
    %1122 = vmatpush2.msra.mxu0 0.0
    %1123 = vmatprep.subr.mxu0 0.0
    %1124 = vmatpush2.msra.mxu0 0.0
    %1125 = vmatprep.subr.mxu0 0.0
    %1126 = vmatpush2.msra.mxu0 0.0
    %1127 = vmatprep.subr.mxu0 0.0
    %1128 = vmatpush2.msra.mxu0 0.0
    %1129 = vmatprep.mubr.f32.mxu0 0.0
    %1130 = vmatmul.mubr.f32.gmra.mxu0 %v1063
    %v1131 = vpop.f32.mrf.mxu0
    %v1132 = vadd.f32 0.0, %v1131
    %v1133 = vpop.f32.mrf.mxu0
    %1134 = vdwg.mxu0
    %v1135 = vmul.f32 %v1057, %v1057
    %v1137 = vsel %vm88, %v1135, 0
    %1139 = vmatprep.subr.mxu0 0.0
    %1140 = vmatpush1.msra.mxu0 0.0
    %1141 = vmatprep.subr.mxu0 0.0
    %1142 = vmatpush1.msra.mxu0 0.0
    %1143 = vmatprep.subr.mxu0 0.0
    %1144 = vmatpush1.msra.mxu0 0.0
    %1145 = vmatprep.subr.mxu0 0.0
    %1146 = vmatpush1.msra.mxu0 0.0
    %1147 = vmatprep.subr.mxu0 0.0
    %1148 = vmatpush1.msra.mxu0 0.0
    %1149 = vmatprep.subr.mxu0 0.0
    %1150 = vmatpush1.msra.mxu0 0.0
    %1151 = vmatprep.subr.mxu0 0.0
    %1152 = vmatpush1.msra.mxu0 0.0
    %1153 = vmatprep.subr.mxu0 0.0
    %1154 = vmatpush1.msra.mxu0 0.0
    %1155 = vmatprep.subr.mxu0 0.0
    %1156 = vmatpush1.msra.mxu0 0.0
    %1157 = vmatprep.subr.mxu0 0.0
    %1158 = vmatpush1.msra.mxu0 0.0
    %1159 = vmatprep.subr.mxu0 0.0
    %1160 = vmatpush1.msra.mxu0 0.0
    %1161 = vmatprep.subr.mxu0 0.0
    %1162 = vmatpush1.msra.mxu0 %v97
    %1163 = vmatprep.subr.mxu0 0.0
    %1164 = vmatpush1.msra.mxu0 %v78
    %1165 = vmatprep.subr.mxu0 0.0
    %1166 = vmatpush1.msra.mxu0 %v77
    %1167 = vmatprep.subr.mxu0 0.0
    %1168 = vmatpush1.msra.mxu0 %v76
    %1169 = vmatprep.subr.mxu0 0.0
    %1170 = vmatpush1.msra.mxu0 %v75
    %1171 = vmatprep.subr.mxu0 0.0
    %1172 = vmatpush2.msra.mxu0 0.0
    %1173 = vmatprep.subr.mxu0 0.0
    %1174 = vmatpush2.msra.mxu0 0.0
    %1175 = vmatprep.subr.mxu0 0.0
    %1176 = vmatpush2.msra.mxu0 0.0
    %1177 = vmatprep.subr.mxu0 0.0
    %1178 = vmatpush2.msra.mxu0 0.0
    %1179 = vmatprep.subr.mxu0 0.0
    %1180 = vmatpush2.msra.mxu0 0.0
    %1181 = vmatprep.subr.mxu0 0.0
    %1182 = vmatpush2.msra.mxu0 0.0
    %1183 = vmatprep.subr.mxu0 0.0
    %1184 = vmatpush2.msra.mxu0 0.0
    %1185 = vmatprep.subr.mxu0 0.0
    %1186 = vmatpush2.msra.mxu0 0.0
    %1187 = vmatprep.subr.mxu0 0.0
    %1188 = vmatpush2.msra.mxu0 0.0
    %1189 = vmatprep.subr.mxu0 0.0
    %1190 = vmatpush2.msra.mxu0 0.0
    %1191 = vmatprep.subr.mxu0 0.0
    %1192 = vmatpush2.msra.mxu0 0.0
    %1193 = vmatprep.subr.mxu0 0.0
    %1194 = vmatpush2.msra.mxu0 0.0
    %1195 = vmatprep.subr.mxu0 0.0
    %1196 = vmatpush2.msra.mxu0 0.0
    %1197 = vmatprep.subr.mxu0 0.0
    %1198 = vmatpush2.msra.mxu0 0.0
    %1199 = vmatprep.subr.mxu0 0.0
    %1200 = vmatpush2.msra.mxu0 0.0
    %1201 = vmatprep.subr.mxu0 0.0
    %1202 = vmatpush2.msra.mxu0 0.0
    %1203 = vmatprep.mubr.f32.mxu0 0.0
    %1204 = vmatmul.mubr.f32.gmra.mxu0 %v1137
    %v1205 = vpop.f32.mrf.mxu0
    %v1206 = vadd.f32 0.0, %v1205
    %v1207 = vpop.f32.mrf.mxu0
    %1208 = vdwg.mxu0
    %vm1209 = vcmask 64512
    %v1211 = vsel %vm1209, %v1058, 0
    %1213 = vmatprep.subr.mxu0 0.0
    %1214 = vmatpush1.msra.mxu0 0.0
    %1215 = vmatprep.subr.mxu0 0.0
    %1216 = vmatpush1.msra.mxu0 0.0
    %1217 = vmatprep.subr.mxu0 0.0
    %1218 = vmatpush1.msra.mxu0 0.0
    %1219 = vmatprep.subr.mxu0 0.0
    %1220 = vmatpush1.msra.mxu0 0.0
    %1221 = vmatprep.subr.mxu0 0.0
    %1222 = vmatpush1.msra.mxu0 0.0
    %1223 = vmatprep.subr.mxu0 0.0
    %1224 = vmatpush1.msra.mxu0 0.0
    %1225 = vmatprep.subr.mxu0 0.0
    %1226 = vmatpush1.msra.mxu0 0.0
    %1227 = vmatprep.subr.mxu0 0.0
    %1228 = vmatpush1.msra.mxu0 0.0
    %1229 = vmatprep.subr.mxu0 0.0
    %1230 = vmatpush1.msra.mxu0 0.0
    %1231 = vmatprep.subr.mxu0 0.0
    %1232 = vmatpush1.msra.mxu0 0.0
    %1233 = vmatprep.subr.mxu0 0.0
    %1234 = vmatpush1.msra.mxu0 0.0
    %1235 = vmatprep.subr.mxu0 0.0
    %1236 = vmatpush1.msra.mxu0 0.0
    %1237 = vmatprep.subr.mxu0 0.0
    %1238 = vmatpush1.msra.mxu0 0.0
    %1239 = vmatprep.subr.mxu0 0.0
    %1240 = vmatpush1.msra.mxu0 0.0
    %1241 = vmatprep.subr.mxu0 0.0
    %1242 = vmatpush1.msra.mxu0 0.0
    %1243 = vmatprep.subr.mxu0 0.0
    %1244 = vmatpush1.msra.mxu0 %v1132
    %1245 = vmatprep.subr.mxu0 0.0
    %1246 = vmatpush2.msra.mxu0 0.0
    %1247 = vmatprep.subr.mxu0 0.0
    %1248 = vmatpush2.msra.mxu0 0.0
    %1249 = vmatprep.subr.mxu0 0.0
    %1250 = vmatpush2.msra.mxu0 0.0
    %1251 = vmatprep.subr.mxu0 0.0
    %1252 = vmatpush2.msra.mxu0 0.0
    %1253 = vmatprep.subr.mxu0 0.0
    %1254 = vmatpush2.msra.mxu0 0.0
    %1255 = vmatprep.subr.mxu0 0.0
    %1256 = vmatpush2.msra.mxu0 0.0
    %1257 = vmatprep.subr.mxu0 0.0
    %1258 = vmatpush2.msra.mxu0 0.0
    %1259 = vmatprep.subr.mxu0 0.0
    %1260 = vmatpush2.msra.mxu0 0.0
    %1261 = vmatprep.subr.mxu0 0.0
    %1262 = vmatpush2.msra.mxu0 0.0
    %1263 = vmatprep.subr.mxu0 0.0
    %1264 = vmatpush2.msra.mxu0 0.0
    %1265 = vmatprep.subr.mxu0 0.0
    %1266 = vmatpush2.msra.mxu0 0.0
    %1267 = vmatprep.subr.mxu0 0.0
    %1268 = vmatpush2.msra.mxu0 0.0
    %1269 = vmatprep.subr.mxu0 0.0
    %1270 = vmatpush2.msra.mxu0 0.0
    %1271 = vmatprep.subr.mxu0 0.0
    %1272 = vmatpush2.msra.mxu0 0.0
    %1273 = vmatprep.subr.mxu0 0.0
    %1274 = vmatpush2.msra.mxu0 0.0
    %1275 = vmatprep.subr.mxu0 0.0
    %1276 = vmatpush2.msra.mxu0 0.0
    %1277 = vmatprep.mubr.f32.mxu0 0.0
    %1278 = vmatmul.mubr.f32.gmra.mxu0 %v1211
    %v1279 = vpop.f32.mrf.mxu0
    %v1280 = vadd.f32 0.0, %v1279
    %v1281 = vpop.f32.mrf.mxu0
    %1282 = vdwg.mxu0
    %v1283 = vmul.f32 %v1280, 0.015625
    %1284 = vmatprep.subr.mxu0 0.0
    %1285 = vmatpush1.msra.mxu0 0.0
    %1286 = vmatprep.subr.mxu0 0.0
    %1287 = vmatpush1.msra.mxu0 0.0
    %1288 = vmatprep.subr.mxu0 0.0
    %1289 = vmatpush1.msra.mxu0 0.0
    %1290 = vmatprep.subr.mxu0 0.0
    %1291 = vmatpush1.msra.mxu0 0.0
    %1292 = vmatprep.subr.mxu0 0.0
    %1293 = vmatpush1.msra.mxu0 0.0
    %1294 = vmatprep.subr.mxu0 0.0
    %1295 = vmatpush1.msra.mxu0 0.0
    %1296 = vmatprep.subr.mxu0 0.0
    %1297 = vmatpush1.msra.mxu0 0.0
    %1298 = vmatprep.subr.mxu0 0.0
    %1299 = vmatpush1.msra.mxu0 0.0
    %1300 = vmatprep.subr.mxu0 0.0
    %1301 = vmatpush1.msra.mxu0 0.0
    %1302 = vmatprep.subr.mxu0 0.0
    %1303 = vmatpush1.msra.mxu0 0.0
    %1304 = vmatprep.subr.mxu0 0.0
    %1305 = vmatpush1.msra.mxu0 0.0
    %1306 = vmatprep.subr.mxu0 0.0
    %1307 = vmatpush1.msra.mxu0 0.0
    %1308 = vmatprep.subr.mxu0 0.0
    %1309 = vmatpush1.msra.mxu0 0.0
    %1310 = vmatprep.subr.mxu0 0.0
    %1311 = vmatpush1.msra.mxu0 0.0
    %1312 = vmatprep.subr.mxu0 0.0
    %1313 = vmatpush1.msra.mxu0 0.0
    %1314 = vmatprep.subr.mxu0 0.0
    %1315 = vmatpush1.msra.mxu0 %v1206
    %1316 = vmatprep.subr.mxu0 0.0
    %1317 = vmatpush2.msra.mxu0 0.0
    %1318 = vmatprep.subr.mxu0 0.0
    %1319 = vmatpush2.msra.mxu0 0.0
    %1320 = vmatprep.subr.mxu0 0.0
    %1321 = vmatpush2.msra.mxu0 0.0
    %1322 = vmatprep.subr.mxu0 0.0
    %1323 = vmatpush2.msra.mxu0 0.0
    %1324 = vmatprep.subr.mxu0 0.0
    %1325 = vmatpush2.msra.mxu0 0.0
    %1326 = vmatprep.subr.mxu0 0.0
    %1327 = vmatpush2.msra.mxu0 0.0
    %1328 = vmatprep.subr.mxu0 0.0
    %1329 = vmatpush2.msra.mxu0 0.0
    %1330 = vmatprep.subr.mxu0 0.0
    %1331 = vmatpush2.msra.mxu0 0.0
    %1332 = vmatprep.subr.mxu0 0.0
    %1333 = vmatpush2.msra.mxu0 0.0
    %1334 = vmatprep.subr.mxu0 0.0
    %1335 = vmatpush2.msra.mxu0 0.0
    %1336 = vmatprep.subr.mxu0 0.0
    %1337 = vmatpush2.msra.mxu0 0.0
    %1338 = vmatprep.subr.mxu0 0.0
    %1339 = vmatpush2.msra.mxu0 0.0
    %1340 = vmatprep.subr.mxu0 0.0
    %1341 = vmatpush2.msra.mxu0 0.0
    %1342 = vmatprep.subr.mxu0 0.0
    %1343 = vmatpush2.msra.mxu0 0.0
    %1344 = vmatprep.subr.mxu0 0.0
    %1345 = vmatpush2.msra.mxu0 0.0
    %1346 = vmatprep.subr.mxu0 0.0
    %1347 = vmatpush2.msra.mxu0 0.0
    %1348 = vmatprep.mubr.f32.mxu0 0.0
    %1349 = vmatmul.mubr.f32.gmra.mxu0 %v1211
    %v1350 = vpop.f32.mrf.mxu0
    %v1351 = vadd.f32 0.0, %v1350
    %v1352 = vpop.f32.mrf.mxu0
    %1353 = vdwg.mxu0
    %v1354 = vmul.f32 %v1351, 0.015625
    %v1355 = vmul.f32 %v1283, %v1283
    %v1356 = vsub.f32 %v1354, %v1355
    %v1357 = vadd.f32 %v1356, 1e-05
    %v1358 = vrsqrt.pop %v1357
    %v1360 = vsel %vm499, %v1059, 0
    %v1363 = vsel %vm506, %v1283, 0
    %1365 = vmatprep.subr.mxu0 0.0
    %1366 = vmatpush1.msra.mxu0 0.0
    %1367 = vmatprep.subr.mxu0 0.0
    %1368 = vmatpush1.msra.mxu0 0.0
    %1369 = vmatprep.subr.mxu0 0.0
    %1370 = vmatpush1.msra.mxu0 0.0
    %1371 = vmatprep.subr.mxu0 0.0
    %1372 = vmatpush1.msra.mxu0 0.0
    %1373 = vmatprep.subr.mxu0 0.0
    %1374 = vmatpush1.msra.mxu0 0.0
    %1375 = vmatprep.subr.mxu0 0.0
    %1376 = vmatpush1.msra.mxu0 0.0
    %1377 = vmatprep.subr.mxu0 0.0
    %1378 = vmatpush1.msra.mxu0 0.0
    %1379 = vmatprep.subr.mxu0 0.0
    %1380 = vmatpush1.msra.mxu0 0.0
    %1381 = vmatprep.subr.mxu0 0.0
    %1382 = vmatpush1.msra.mxu0 0.0
    %1383 = vmatprep.subr.mxu0 0.0
    %1384 = vmatpush1.msra.mxu0 0.0
    %1385 = vmatprep.subr.mxu0 0.0
    %1386 = vmatpush1.msra.mxu0 0.0
    %1387 = vmatprep.subr.mxu0 0.0
    %1388 = vmatpush1.msra.mxu0 0.0
    %1389 = vmatprep.subr.mxu0 0.0
    %1390 = vmatpush1.msra.mxu0 0.0
    %1391 = vmatprep.subr.mxu0 0.0
    %1392 = vmatpush1.msra.mxu0 0.0
    %1393 = vmatprep.subr.mxu0 0.0
    %1394 = vmatpush1.msra.mxu0 0.0
    %1395 = vmatprep.subr.mxu0 0.0
    %1396 = vmatpush1.msra.mxu0 %v1363
    %1397 = vmatprep.subr.mxu0 0.0
    %1398 = vmatpush2.msra.mxu0 0.0
    %1399 = vmatprep.subr.mxu0 0.0
    %1400 = vmatpush2.msra.mxu0 0.0
    %1401 = vmatprep.subr.mxu0 0.0
    %1402 = vmatpush2.msra.mxu0 0.0
    %1403 = vmatprep.subr.mxu0 0.0
    %1404 = vmatpush2.msra.mxu0 0.0
    %1405 = vmatprep.subr.mxu0 0.0
    %1406 = vmatpush2.msra.mxu0 0.0
    %1407 = vmatprep.subr.mxu0 0.0
    %1408 = vmatpush2.msra.mxu0 0.0
    %1409 = vmatprep.subr.mxu0 0.0
    %1410 = vmatpush2.msra.mxu0 0.0
    %1411 = vmatprep.subr.mxu0 0.0
    %1412 = vmatpush2.msra.mxu0 0.0
    %1413 = vmatprep.subr.mxu0 0.0
    %1414 = vmatpush2.msra.mxu0 0.0
    %1415 = vmatprep.subr.mxu0 0.0
    %1416 = vmatpush2.msra.mxu0 0.0
    %1417 = vmatprep.subr.mxu0 0.0
    %1418 = vmatpush2.msra.mxu0 0.0
    %1419 = vmatprep.subr.mxu0 0.0
    %1420 = vmatpush2.msra.mxu0 0.0
    %1421 = vmatprep.subr.mxu0 0.0
    %1422 = vmatpush2.msra.mxu0 0.0
    %1423 = vmatprep.subr.mxu0 0.0
    %1424 = vmatpush2.msra.mxu0 0.0
    %1425 = vmatprep.subr.mxu0 0.0
    %1426 = vmatpush2.msra.mxu0 0.0
    %1427 = vmatprep.subr.mxu0 0.0
    %1428 = vmatpush2.msra.mxu0 0.0
    %1429 = vmatprep.mubr.f32.mxu0 0.0
    %1430 = vmatmul.mubr.f32.gmra.mxu0 %v1360
    %v1431 = vpop.f32.mrf.mxu0
    %v1432 = vadd.f32 0.0, %v1431
    %v1433 = vpop.f32.mrf.mxu0
    %1434 = vdwg.mxu0
    %v1436 = vsel %vm499, %v1432, 0
    %1438 = vmatprep.subr.mxu0 0.0
    %1439 = vmatpush1.msra.mxu0 0.0
    %1440 = vmatprep.subr.mxu0 0.0
    %1441 = vmatpush1.msra.mxu0 0.0
    %1442 = vmatprep.subr.mxu0 0.0
    %1443 = vmatpush1.msra.mxu0 0.0
    %1444 = vmatprep.subr.mxu0 0.0
    %1445 = vmatpush1.msra.mxu0 0.0
    %1446 = vmatprep.subr.mxu0 0.0
    %1447 = vmatpush1.msra.mxu0 0.0
    %1448 = vmatprep.subr.mxu0 0.0
    %1449 = vmatpush1.msra.mxu0 0.0
    %1450 = vmatprep.subr.mxu0 0.0
    %1451 = vmatpush1.msra.mxu0 0.0
    %1452 = vmatprep.subr.mxu0 0.0
    %1453 = vmatpush1.msra.mxu0 0.0
    %1454 = vmatprep.subr.mxu0 0.0
    %1455 = vmatpush1.msra.mxu0 0.0
    %1456 = vmatprep.subr.mxu0 0.0
    %1457 = vmatpush1.msra.mxu0 0.0
    %1458 = vmatprep.subr.mxu0 0.0
    %1459 = vmatpush1.msra.mxu0 0.0
    %1460 = vmatprep.subr.mxu0 0.0
    %1461 = vmatpush1.msra.mxu0 0.0
    %1462 = vmatprep.subr.mxu0 0.0
    %1463 = vmatpush1.msra.mxu0 0.0
    %1464 = vmatprep.subr.mxu0 0.0
    %1465 = vmatpush1.msra.mxu0 0.0
    %1466 = vmatprep.subr.mxu0 0.0
    %1467 = vmatpush1.msra.mxu0 0.0
    %1468 = vmatprep.subr.mxu0 0.0
    %1469 = vmatpush1.msra.mxu0 %v508
    %1470 = vmatprep.subr.mxu0 0.0
    %1471 = vmatpush2.msra.mxu0 0.0
    %1472 = vmatprep.subr.mxu0 0.0
    %1473 = vmatpush2.msra.mxu0 0.0
    %1474 = vmatprep.subr.mxu0 0.0
    %1475 = vmatpush2.msra.mxu0 0.0
    %1476 = vmatprep.subr.mxu0 0.0
    %1477 = vmatpush2.msra.mxu0 0.0
    %1478 = vmatprep.subr.mxu0 0.0
    %1479 = vmatpush2.msra.mxu0 0.0
    %1480 = vmatprep.subr.mxu0 0.0
    %1481 = vmatpush2.msra.mxu0 0.0
    %1482 = vmatprep.subr.mxu0 0.0
    %1483 = vmatpush2.msra.mxu0 0.0
    %1484 = vmatprep.subr.mxu0 0.0
    %1485 = vmatpush2.msra.mxu0 0.0
    %1486 = vmatprep.subr.mxu0 0.0
    %1487 = vmatpush2.msra.mxu0 0.0
    %1488 = vmatprep.subr.mxu0 0.0
    %1489 = vmatpush2.msra.mxu0 0.0
    %1490 = vmatprep.subr.mxu0 0.0
    %1491 = vmatpush2.msra.mxu0 0.0
    %1492 = vmatprep.subr.mxu0 0.0
    %1493 = vmatpush2.msra.mxu0 0.0
    %1494 = vmatprep.subr.mxu0 0.0
    %1495 = vmatpush2.msra.mxu0 0.0
    %1496 = vmatprep.subr.mxu0 0.0
    %1497 = vmatpush2.msra.mxu0 0.0
    %1498 = vmatprep.subr.mxu0 0.0
    %1499 = vmatpush2.msra.mxu0 0.0
    %1500 = vmatprep.subr.mxu0 0.0
    %1501 = vmatpush2.msra.mxu0 0.0
    %1502 = vmatprep.mubr.f32.mxu0 0.0
    %1503 = vmatmul.mubr.f32.gmra.mxu0 %v1436
    %v1504 = vpop.f32.mrf.mxu0
    %v1505 = vadd.f32 0.0, %v1504
    %v1506 = vpop.f32.mrf.mxu0
    %1507 = vdwg.mxu0
    %v1509 = vsel %vm506, %v1358, 0
    %1511 = vmatprep.subr.mxu0 0.0
    %1512 = vmatpush1.msra.mxu0 0.0
    %1513 = vmatprep.subr.mxu0 0.0
    %1514 = vmatpush1.msra.mxu0 0.0
    %1515 = vmatprep.subr.mxu0 0.0
    %1516 = vmatpush1.msra.mxu0 0.0
    %1517 = vmatprep.subr.mxu0 0.0
    %1518 = vmatpush1.msra.mxu0 0.0
    %1519 = vmatprep.subr.mxu0 0.0
    %1520 = vmatpush1.msra.mxu0 0.0
    %1521 = vmatprep.subr.mxu0 0.0
    %1522 = vmatpush1.msra.mxu0 0.0
    %1523 = vmatprep.subr.mxu0 0.0
    %1524 = vmatpush1.msra.mxu0 0.0
    %1525 = vmatprep.subr.mxu0 0.0
    %1526 = vmatpush1.msra.mxu0 0.0
    %1527 = vmatprep.subr.mxu0 0.0
    %1528 = vmatpush1.msra.mxu0 0.0
    %1529 = vmatprep.subr.mxu0 0.0
    %1530 = vmatpush1.msra.mxu0 0.0
    %1531 = vmatprep.subr.mxu0 0.0
    %1532 = vmatpush1.msra.mxu0 0.0
    %1533 = vmatprep.subr.mxu0 0.0
    %1534 = vmatpush1.msra.mxu0 0.0
    %1535 = vmatprep.subr.mxu0 0.0
    %1536 = vmatpush1.msra.mxu0 0.0
    %1537 = vmatprep.subr.mxu0 0.0
    %1538 = vmatpush1.msra.mxu0 0.0
    %1539 = vmatprep.subr.mxu0 0.0
    %1540 = vmatpush1.msra.mxu0 0.0
    %1541 = vmatprep.subr.mxu0 0.0
    %1542 = vmatpush1.msra.mxu0 %v1509
    %1543 = vmatprep.subr.mxu0 0.0
    %1544 = vmatpush2.msra.mxu0 0.0
    %1545 = vmatprep.subr.mxu0 0.0
    %1546 = vmatpush2.msra.mxu0 0.0
    %1547 = vmatprep.subr.mxu0 0.0
    %1548 = vmatpush2.msra.mxu0 0.0
    %1549 = vmatprep.subr.mxu0 0.0
    %1550 = vmatpush2.msra.mxu0 0.0
    %1551 = vmatprep.subr.mxu0 0.0
    %1552 = vmatpush2.msra.mxu0 0.0
    %1553 = vmatprep.subr.mxu0 0.0
    %1554 = vmatpush2.msra.mxu0 0.0
    %1555 = vmatprep.subr.mxu0 0.0
    %1556 = vmatpush2.msra.mxu0 0.0
    %1557 = vmatprep.subr.mxu0 0.0
    %1558 = vmatpush2.msra.mxu0 0.0
    %1559 = vmatprep.subr.mxu0 0.0
    %1560 = vmatpush2.msra.mxu0 0.0
    %1561 = vmatprep.subr.mxu0 0.0
    %1562 = vmatpush2.msra.mxu0 0.0
    %1563 = vmatprep.subr.mxu0 0.0
    %1564 = vmatpush2.msra.mxu0 0.0
    %1565 = vmatprep.subr.mxu0 0.0
    %1566 = vmatpush2.msra.mxu0 0.0
    %1567 = vmatprep.subr.mxu0 0.0
    %1568 = vmatpush2.msra.mxu0 0.0
    %1569 = vmatprep.subr.mxu0 0.0
    %1570 = vmatpush2.msra.mxu0 0.0
    %1571 = vmatprep.subr.mxu0 0.0
    %1572 = vmatpush2.msra.mxu0 0.0
    %1573 = vmatprep.subr.mxu0 0.0
    %1574 = vmatpush2.msra.mxu0 0.0
    %1575 = vmatprep.mubr.f32.mxu0 0.0
    %1576 = vmatmul.mubr.f32.gmra.mxu0 %v1360
    %v1577 = vpop.f32.mrf.mxu0
    %v1578 = vadd.f32 0.0, %v1577
    %v1579 = vpop.f32.mrf.mxu0
    %1580 = vdwg.mxu0
    %v1582 = vsel %vm499, %v1578, 0
    %1584 = vmatprep.subr.mxu0 0.0
    %1585 = vmatpush1.msra.mxu0 0.0
    %1586 = vmatprep.subr.mxu0 0.0
    %1587 = vmatpush1.msra.mxu0 0.0
    %1588 = vmatprep.subr.mxu0 0.0
    %1589 = vmatpush1.msra.mxu0 0.0
    %1590 = vmatprep.subr.mxu0 0.0
    %1591 = vmatpush1.msra.mxu0 0.0
    %1592 = vmatprep.subr.mxu0 0.0
    %1593 = vmatpush1.msra.mxu0 0.0
    %1594 = vmatprep.subr.mxu0 0.0
    %1595 = vmatpush1.msra.mxu0 0.0
    %1596 = vmatprep.subr.mxu0 0.0
    %1597 = vmatpush1.msra.mxu0 0.0
    %1598 = vmatprep.subr.mxu0 0.0
    %1599 = vmatpush1.msra.mxu0 0.0
    %1600 = vmatprep.subr.mxu0 0.0
    %1601 = vmatpush1.msra.mxu0 0.0
    %1602 = vmatprep.subr.mxu0 0.0
    %1603 = vmatpush1.msra.mxu0 0.0
    %1604 = vmatprep.subr.mxu0 0.0
    %1605 = vmatpush1.msra.mxu0 0.0
    %1606 = vmatprep.subr.mxu0 0.0
    %1607 = vmatpush1.msra.mxu0 0.0
    %1608 = vmatprep.subr.mxu0 0.0
    %1609 = vmatpush1.msra.mxu0 0.0
    %1610 = vmatprep.subr.mxu0 0.0
    %1611 = vmatpush1.msra.mxu0 0.0
    %1612 = vmatprep.subr.mxu0 0.0
    %1613 = vmatpush1.msra.mxu0 0.0
    %1614 = vmatprep.subr.mxu0 0.0
    %1615 = vmatpush1.msra.mxu0 %v508
    %1616 = vmatprep.subr.mxu0 0.0
    %1617 = vmatpush2.msra.mxu0 0.0
    %1618 = vmatprep.subr.mxu0 0.0
    %1619 = vmatpush2.msra.mxu0 0.0
    %1620 = vmatprep.subr.mxu0 0.0
    %1621 = vmatpush2.msra.mxu0 0.0
    %1622 = vmatprep.subr.mxu0 0.0
    %1623 = vmatpush2.msra.mxu0 0.0
    %1624 = vmatprep.subr.mxu0 0.0
    %1625 = vmatpush2.msra.mxu0 0.0
    %1626 = vmatprep.subr.mxu0 0.0
    %1627 = vmatpush2.msra.mxu0 0.0
    %1628 = vmatprep.subr.mxu0 0.0
    %1629 = vmatpush2.msra.mxu0 0.0
    %1630 = vmatprep.subr.mxu0 0.0
    %1631 = vmatpush2.msra.mxu0 0.0
    %1632 = vmatprep.subr.mxu0 0.0
    %1633 = vmatpush2.msra.mxu0 0.0
    %1634 = vmatprep.subr.mxu0 0.0
    %1635 = vmatpush2.msra.mxu0 0.0
    %1636 = vmatprep.subr.mxu0 0.0
    %1637 = vmatpush2.msra.mxu0 0.0
    %1638 = vmatprep.subr.mxu0 0.0
    %1639 = vmatpush2.msra.mxu0 0.0
    %1640 = vmatprep.subr.mxu0 0.0
    %1641 = vmatpush2.msra.mxu0 0.0
    %1642 = vmatprep.subr.mxu0 0.0
    %1643 = vmatpush2.msra.mxu0 0.0
    %1644 = vmatprep.subr.mxu0 0.0
    %1645 = vmatpush2.msra.mxu0 0.0
    %1646 = vmatprep.subr.mxu0 0.0
    %1647 = vmatpush2.msra.mxu0 0.0
    %1648 = vmatprep.mubr.f32.mxu0 0.0
    %1649 = vmatmul.mubr.f32.gmra.mxu0 %v1582
    %v1650 = vpop.f32.mrf.mxu0
    %v1651 = vadd.f32 0.0, %v1650
    %v1652 = vpop.f32.mrf.mxu0
    %1653 = vdwg.mxu0
    %v1654 = vsub.f32 %v1056, %v1505
    %v1655 = vmul.f32 %v1654, %v1651
    %1657 = vset.pattern.permute.xlu0 0
    %1658 = vperm.xlu0 %1657, %v1060
    %v1659 = vpop.permute.xlu0 %1658
    %v1661 = vmul.f32 %v1655, %v1659
    %1663 = vset.pattern.permute.xlu0 0
    %1664 = vperm.xlu0 %1663, %v1061
    %v1665 = vpop.permute.xlu0 %1664
    %v1667 = vadd.f32 %v1661, %v1665
    %v1668 = vxor.u32 %v1667, 2147483648
    %v1669 = vmul.f32 %v1668, 1.442695
    %v1670 = vpow.pop %v1669
    %v1671 = vadd.f32 %v1670, 1.0
    %v1672 = vrcp.pop %v1671
    %v1673 = vmul.f32 1.0, %v1672
    %v1674 = vmul.f32 %v1667, %v1673
    %v1675 = vmul.f32 %v1674, %v790
    %1677 = vrot.lane.b32.xlu0 %v1675, 1
    %v1678 = vpop.permute.xlu0 %1677
    %v1680 = vsel %vm802, 0.0, %v1678
    %v1681 = vsel %vm805, %v1680, 0.0
    %1683 = vrot.lane.b32.xlu0 %v1681, 127
    %v1684 = vpop.permute.xlu0 %1683
    %1686 = vrot.lane.b32.xlu0 %v1681, 126
    %v1687 = vpop.permute.xlu0 %1686
    %v1689 = vld [vmem:[%s16] sm:$0xff]
    %v1690 = vld [vmem:[%s17] sm:$0xff]
    %1692 = vset.pattern.permute.xlu0 0
    %1693 = vperm.xlu0 %1692, %v1690
    %v1694 = vpop.permute.xlu0 %1693
    %vm1696 = vcmask 195584
    %v1698 = vsel %vm1696, %v1689, 0
    %1700 = vmatprep.subr.mxu0 0.0
    %1701 = vmatpush1.msra.mxu0 0.0
    %1702 = vmatprep.subr.mxu0 0.0
    %1703 = vmatpush1.msra.mxu0 0.0
    %1704 = vmatprep.subr.mxu0 0.0
    %1705 = vmatpush1.msra.mxu0 0.0
    %1706 = vmatprep.subr.mxu0 0.0
    %1707 = vmatpush1.msra.mxu0 0.0
    %1708 = vmatprep.subr.mxu0 0.0
    %1709 = vmatpush1.msra.mxu0 0.0
    %1710 = vmatprep.subr.mxu0 0.0
    %1711 = vmatpush1.msra.mxu0 0.0
    %1712 = vmatprep.subr.mxu0 0.0
    %1713 = vmatpush1.msra.mxu0 0.0
    %1714 = vmatprep.subr.mxu0 0.0
    %1715 = vmatpush1.msra.mxu0 0.0
    %1716 = vmatprep.subr.mxu0 0.0
    %1717 = vmatpush1.msra.mxu0 0.0
    %1718 = vmatprep.subr.mxu0 0.0
    %1719 = vmatpush1.msra.mxu0 0.0
    %1720 = vmatprep.subr.mxu0 0.0
    %1721 = vmatpush1.msra.mxu0 0.0
    %1722 = vmatprep.subr.mxu0 0.0
    %1723 = vmatpush1.msra.mxu0 0.0
    %1724 = vmatprep.subr.mxu0 0.0
    %1725 = vmatpush1.msra.mxu0 0.0
    %1726 = vmatprep.subr.mxu0 0.0
    %1727 = vmatpush1.msra.mxu0 %v1687
    %1728 = vmatprep.subr.mxu0 0.0
    %1729 = vmatpush1.msra.mxu0 %v1684
    %1730 = vmatprep.subr.mxu0 0.0
    %1731 = vmatpush1.msra.mxu0 %v1681
    %1732 = vmatprep.subr.mxu0 0.0
    %1733 = vmatpush2.msra.mxu0 0.0
    %1734 = vmatprep.subr.mxu0 0.0
    %1735 = vmatpush2.msra.mxu0 0.0
    %1736 = vmatprep.subr.mxu0 0.0
    %1737 = vmatpush2.msra.mxu0 0.0
    %1738 = vmatprep.subr.mxu0 0.0
    %1739 = vmatpush2.msra.mxu0 0.0
    %1740 = vmatprep.subr.mxu0 0.0
    %1741 = vmatpush2.msra.mxu0 0.0
    %1742 = vmatprep.subr.mxu0 0.0
    %1743 = vmatpush2.msra.mxu0 0.0
    %1744 = vmatprep.subr.mxu0 0.0
    %1745 = vmatpush2.msra.mxu0 0.0
    %1746 = vmatprep.subr.mxu0 0.0
    %1747 = vmatpush2.msra.mxu0 0.0
    %1748 = vmatprep.subr.mxu0 0.0
    %1749 = vmatpush2.msra.mxu0 0.0
    %1750 = vmatprep.subr.mxu0 0.0
    %1751 = vmatpush2.msra.mxu0 0.0
    %1752 = vmatprep.subr.mxu0 0.0
    %1753 = vmatpush2.msra.mxu0 0.0
    %1754 = vmatprep.subr.mxu0 0.0
    %1755 = vmatpush2.msra.mxu0 0.0
    %1756 = vmatprep.subr.mxu0 0.0
    %1757 = vmatpush2.msra.mxu0 0.0
    %1758 = vmatprep.subr.mxu0 0.0
    %1759 = vmatpush2.msra.mxu0 0.0
    %1760 = vmatprep.subr.mxu0 0.0
    %1761 = vmatpush2.msra.mxu0 0.0
    %1762 = vmatprep.subr.mxu0 0.0
    %1763 = vmatpush2.msra.mxu0 0.0
    %1764 = vmatprep.mubr.f32.mxu0 0.0
    %1765 = vmatmul.mubr.f32.gmra.mxu0 %v1698
    %v1766 = vpop.f32.mrf.mxu0
    %v1767 = vadd.f32 %v1694, %v1766
    %v1768 = vpop.f32.mrf.mxu0
    %1769 = vdwg.mxu0
    %v1770 = vadd.f32 %v1767, %v72
    %v1771 = vmul.f32 %v1770, %v790
    %1772 = vst.msk [vmem:[#allocation4] sm:$0xff] %vm88, %v1771
    %1774 = vrot.lane.b32.xlu0 %v1771, 1
    %v1775 = vpop.permute.xlu0 %1774
    %v1777 = vsel %vm802, 0.0, %v1775
    %v1778 = vsel %vm805, %v1777, 0.0
    %1780 = vrot.lane.b32.xlu0 %v1778, 127
    %v1781 = vpop.permute.xlu0 %1780
    %1783 = vrot.lane.b32.xlu0 %v1778, 126
    %v1784 = vpop.permute.xlu0 %1783
    %v1786 = vld [vmem:[%s18] sm:$0xff]
    %v1787 = vld [vmem:[%s18 + $0x8] sm:$0xff]
    %v1789 = vsel %vm1696, %v1786, 0
    %v1792 = vsel %vm1696, %v1787, 0
    %1794 = vmatprep.subr.mxu0 0.0
    %1795 = vmatpush1.msra.mxu0 0.0
    %1796 = vmatprep.subr.mxu0 0.0
    %1797 = vmatpush1.msra.mxu0 0.0
    %1798 = vmatprep.subr.mxu0 0.0
    %1799 = vmatpush1.msra.mxu0 0.0
    %1800 = vmatprep.subr.mxu0 0.0
    %1801 = vmatpush1.msra.mxu0 0.0
    %1802 = vmatprep.subr.mxu0 0.0
    %1803 = vmatpush1.msra.mxu0 0.0
    %1804 = vmatprep.subr.mxu0 0.0
    %1805 = vmatpush1.msra.mxu0 0.0
    %1806 = vmatprep.subr.mxu0 0.0
    %1807 = vmatpush1.msra.mxu0 0.0
    %1808 = vmatprep.subr.mxu0 0.0
    %1809 = vmatpush1.msra.mxu0 0.0
    %1810 = vmatprep.subr.mxu0 0.0
    %1811 = vmatpush1.msra.mxu0 0.0
    %1812 = vmatprep.subr.mxu0 0.0
    %1813 = vmatpush1.msra.mxu0 0.0
    %1814 = vmatprep.subr.mxu0 0.0
    %1815 = vmatpush1.msra.mxu0 0.0
    %1816 = vmatprep.subr.mxu0 0.0
    %1817 = vmatpush1.msra.mxu0 0.0
    %1818 = vmatprep.subr.mxu0 0.0
    %1819 = vmatpush1.msra.mxu0 0.0
    %1820 = vmatprep.subr.mxu0 0.0
    %1821 = vmatpush1.msra.mxu0 %v1784
    %1822 = vmatprep.subr.mxu0 0.0
    %1823 = vmatpush1.msra.mxu0 %v1781
    %1824 = vmatprep.subr.mxu0 0.0
    %1825 = vmatpush1.msra.mxu0 %v1778
    %1826 = vmatprep.subr.mxu0 0.0
    %1827 = vmatpush2.msra.mxu0 0.0
    %1828 = vmatprep.subr.mxu0 0.0
    %1829 = vmatpush2.msra.mxu0 0.0
    %1830 = vmatprep.subr.mxu0 0.0
    %1831 = vmatpush2.msra.mxu0 0.0
    %1832 = vmatprep.subr.mxu0 0.0
    %1833 = vmatpush2.msra.mxu0 0.0
    %1834 = vmatprep.subr.mxu0 0.0
    %1835 = vmatpush2.msra.mxu0 0.0
    %1836 = vmatprep.subr.mxu0 0.0
    %1837 = vmatpush2.msra.mxu0 0.0
    %1838 = vmatprep.subr.mxu0 0.0
    %1839 = vmatpush2.msra.mxu0 0.0
    %1840 = vmatprep.subr.mxu0 0.0
    %1841 = vmatpush2.msra.mxu0 0.0
    %1842 = vmatprep.subr.mxu0 0.0
    %1843 = vmatpush2.msra.mxu0 0.0
    %1844 = vmatprep.subr.mxu0 0.0
    %1845 = vmatpush2.msra.mxu0 0.0
    %1846 = vmatprep.subr.mxu0 0.0
    %1847 = vmatpush2.msra.mxu0 0.0
    %1848 = vmatprep.subr.mxu0 0.0
    %1849 = vmatpush2.msra.mxu0 0.0
    %1850 = vmatprep.subr.mxu0 0.0
    %1851 = vmatpush2.msra.mxu0 0.0
    %1852 = vmatprep.subr.mxu0 0.0
    %1853 = vmatpush2.msra.mxu0 0.0
    %1854 = vmatprep.subr.mxu0 0.0
    %1855 = vmatpush2.msra.mxu0 0.0
    %1856 = vmatprep.subr.mxu0 0.0
    %1857 = vmatpush2.msra.mxu0 0.0
    %1858 = vmatprep.mubr.f32.mxu0 0.0
    %1859 = vmatmul.mubr.f32.gmra.mxu0 %v1789
    %v1860 = vpop.f32.mrf.mxu0
    %v1861 = vadd.f32 0.0, %v1860
    %v1862 = vpop.f32.mrf.mxu0
    %1863 = vmatprep.mubr.f32.mxu0 0.0
    %1864 = vmatmul.mubr.f32.gmra.mxu0 %v1792
    %v1865 = vpop.f32.mrf.mxu0
    %v1866 = vadd.f32 0.0, %v1865
    %v1867 = vpop.f32.mrf.mxu0
    %1868 = vdwg.mxu0
    %v1869 = vld [vmem:[%s20] sm:$0xff]
    %v1870 = vld [vmem:[%s20 + $0x8] sm:$0xff]
    %v1871 = vld [vmem:[%s20 + $0x10] sm:$0xff]
    %v1872 = vld [vmem:[%s20 + $0x18] sm:$0xff]
    %v1873 = vld [vmem:[%s20 + $0x20] sm:$0xf]
    %v1874 = vld [vmem:[%s19] sm:$0xff]
    %v1875 = vld [vmem:[%s19 + $0x8] sm:$0xff]
    %1877 = vset.pattern.permute.xlu0 0
    %1878 = vperm.xlu0 %1877, %v1874
    %v1879 = vpop.permute.xlu0 %1878
    %1882 = vset.pattern.permute.xlu0 0
    %1883 = vperm.xlu0 %1882, %v1875
    %v1884 = vpop.permute.xlu0 %1883
    %v1887 = vsel %vm88, %v1861, 0
    %v1890 = vsel %vm88, %v1866, 0
    %v1893 = vsel %vm95, %v1873, 0
    %1895 = vmatprep.subr.mxu0 0.0
    %1896 = vmatpush1.msra.mxu0 0.0
    %1897 = vmatprep.subr.mxu0 0.0
    %1898 = vmatpush1.msra.mxu0 0.0
    %1899 = vmatprep.subr.mxu0 0.0
    %1900 = vmatpush1.msra.mxu0 0.0
    %1901 = vmatprep.subr.mxu0 0.0
    %1902 = vmatpush1.msra.mxu0 0.0
    %1903 = vmatprep.subr.mxu0 0.0
    %1904 = vmatpush1.msra.mxu0 0.0
    %1905 = vmatprep.subr.mxu0 0.0
    %1906 = vmatpush1.msra.mxu0 0.0
    %1907 = vmatprep.subr.mxu0 0.0
    %1908 = vmatpush1.msra.mxu0 0.0
    %1909 = vmatprep.subr.mxu0 0.0
    %1910 = vmatpush1.msra.mxu0 0.0
    %1911 = vmatprep.subr.mxu0 0.0
    %1912 = vmatpush1.msra.mxu0 0.0
    %1913 = vmatprep.subr.mxu0 0.0
    %1914 = vmatpush1.msra.mxu0 0.0
    %1915 = vmatprep.subr.mxu0 0.0
    %1916 = vmatpush1.msra.mxu0 0.0
    %1917 = vmatprep.subr.mxu0 0.0
    %1918 = vmatpush1.msra.mxu0 %v1893
    %1919 = vmatprep.subr.mxu0 0.0
    %1920 = vmatpush1.msra.mxu0 %v1872
    %1921 = vmatprep.subr.mxu0 0.0
    %1922 = vmatpush1.msra.mxu0 %v1871
    %1923 = vmatprep.subr.mxu0 0.0
    %1924 = vmatpush1.msra.mxu0 %v1870
    %1925 = vmatprep.subr.mxu0 0.0
    %1926 = vmatpush1.msra.mxu0 %v1869
    %1927 = vmatprep.subr.mxu0 0.0
    %1928 = vmatpush2.msra.mxu0 0.0
    %1929 = vmatprep.subr.mxu0 0.0
    %1930 = vmatpush2.msra.mxu0 0.0
    %1931 = vmatprep.subr.mxu0 0.0
    %1932 = vmatpush2.msra.mxu0 0.0
    %1933 = vmatprep.subr.mxu0 0.0
    %1934 = vmatpush2.msra.mxu0 0.0
    %1935 = vmatprep.subr.mxu0 0.0
    %1936 = vmatpush2.msra.mxu0 0.0
    %1937 = vmatprep.subr.mxu0 0.0
    %1938 = vmatpush2.msra.mxu0 0.0
    %1939 = vmatprep.subr.mxu0 0.0
    %1940 = vmatpush2.msra.mxu0 0.0
    %1941 = vmatprep.subr.mxu0 0.0
    %1942 = vmatpush2.msra.mxu0 0.0
    %1943 = vmatprep.subr.mxu0 0.0
    %1944 = vmatpush2.msra.mxu0 0.0
    %1945 = vmatprep.subr.mxu0 0.0
    %1946 = vmatpush2.msra.mxu0 0.0
    %1947 = vmatprep.subr.mxu0 0.0
    %1948 = vmatpush2.msra.mxu0 0.0
    %1949 = vmatprep.subr.mxu0 0.0
    %1950 = vmatpush2.msra.mxu0 0.0
    %1951 = vmatprep.subr.mxu0 0.0
    %1952 = vmatpush2.msra.mxu0 0.0
    %1953 = vmatprep.subr.mxu0 0.0
    %1954 = vmatpush2.msra.mxu0 0.0
    %1955 = vmatprep.subr.mxu0 0.0
    %1956 = vmatpush2.msra.mxu0 0.0
    %1957 = vmatprep.subr.mxu0 0.0
    %1958 = vmatpush2.msra.mxu0 0.0
    %1959 = vmatprep.mubr.f32.mxu0 0.0
    %1960 = vmatmul.mubr.f32.gmra.mxu0 %v1887
    %v1961 = vpop.f32.mrf.mxu0
    %v1962 = vadd.f32 %v1879, %v1961
    %v1963 = vpop.f32.mrf.mxu0
    %1964 = vmatprep.mubr.f32.mxu0 0.0
    %1965 = vmatmul.mubr.f32.gmra.mxu0 %v1890
    %v1966 = vpop.f32.mrf.mxu0
    %v1967 = vadd.f32 %v1884, %v1966
    %v1968 = vpop.f32.mrf.mxu0
    %1969 = vdwg.mxu0
    %vm1970 = vcmask 130048
    %1971 = vst.msk [vmem:[#allocation2] sm:$0xff] %vm1970, %v1962
    %1972 = vst.msk [vmem:[#allocation2 + $0x8] sm:$0xff] %vm1970, %v1967
    // Predicated region
    $region86: #{tpu_custom_call.1} parent=1 // pred_check
      _
    $region87: #{tpu_custom_call.1} parent=1 // pred_check_branch
      %1974 = sbr.rel (0) target = $region89
    $region88: #{tpu_custom_call.1} parent=1 // pred_region
      %s1976 = ssub.s32 256, 256
      %1977 = vsyncadd [#allocation3], %s1976
      %s1978 = sshll.u32 [#allocation2], 4
      %s1979 = int_to_ptr.vmem [resolvable:$true] %s1978
      %1984 = dma.vmem_to_hbm [thread:$0]  %s1979, 256, %s21, [#allocation3], 128, 128, 8
    $region89: #{tpu_custom_call.1} parent=1 // pred_fallthru
      _
    // Predicated region
    $region90: #{tpu_custom_call.1} parent=1 // pred_check
      _
    $region91: #{tpu_custom_call.1} parent=1 // pred_check_branch
      %1986 = sbr.rel (0) target = $region93
    $region92: #{tpu_custom_call.1} parent=1 // pred_region
      %s1988 = ssub.s32 128, 128
      %1989 = vsyncadd [#allocation5], %s1988
      %s1991 = sshll.u32 [#allocation4], 4
      %s1992 = int_to_ptr.vmem [resolvable:$true] %s1991
      %1994 = dma.vmem_to_hbm [thread:$0]  %s1992, 128, %s22, [#allocation5]
    $region93: #{tpu_custom_call.1} parent=1 // pred_fallthru
      _
    // Predicated region
    $region94: #{tpu_custom_call.1} parent=1 // pred_check
      _
    $region95: #{tpu_custom_call.1} parent=1 // pred_check_branch
      %1996 = sbr.rel (0) target = $region97
    $region96: #{tpu_custom_call.1} parent=1 // pred_region
      %1997 = dma.done [#allocation3], 256
    $region97: #{tpu_custom_call.1} parent=1 // pred_fallthru
      _
    // Predicated region
    $region98: #{tpu_custom_call.1} parent=1 // pred_check
      _
    $region99: #{tpu_custom_call.1} parent=1 // pred_check_branch
      %1999 = sbr.rel (0) target = $region101
    $region100: #{tpu_custom_call.1} parent=1 // pred_region
      %2000 = dma.done [#allocation5], 128
    $region101: #{tpu_custom_call.1} parent=1 // pred_fallthru
      _
    %2001 = vsyncpa [#allocation3], 1
    %2002 = vsyncpa [#allocation5], 1

</llo_original>
